<compile_context>
chip_gen: v5e
topology: v5e:2x2
jax: 0.10.0
libtpu: 0.0.40
codegen_flags: <defaults>
</compile_context>

<pallas_src>
import numpy as np
import jax
import jax.numpy as jnp
from jax import lax
from jax.experimental import pallas as pl
from jax.experimental.pallas import tpu as pltpu

POSE_DIM = 6
HID = 32          # contact-manifold MLP hidden width
AUG = 40          # augmented contraction width: 32 hidden + 1 ones row + 7 pad

_PI = float(np.pi)
_PI_2 = float(np.pi / 2.0)
_PI_4 = float(np.pi / 4.0)
_TAN_PI_8 = 0.41421356237309503
_TAN_3PI_8 = 2.414213562373095


# ----------------------------------------------------------------------------
# in-kernel math helpers (operate on (rows, B) f32 arrays, batch on lanes)
# ----------------------------------------------------------------------------
def _recip(d):
    """approx EUP reciprocal + one Newton step (well within rtol=1e-3)."""
    r = pl.reciprocal(d, approx=True)
    return r * (2.0 - d * r)


def _atan_poly(x):
    """Cephes atanf minimax polynomial, valid for |x| <= tan(pi/8)."""
    z = x * x
    p = 8.05374449538e-2
    p = p * z - 1.38776856032e-1
    p = p * z + 1.99777106478e-1
    p = p * z - 3.33329491539e-1
    return p * z * x + x


def _atan(x):
    ax = jnp.abs(x)
    big = ax > _TAN_3PI_8
    mid = jnp.logical_and(ax > _TAN_PI_8, jnp.logical_not(big))
    ax_safe = jnp.where(ax > 0.0, ax, 1.0)
    inv_ax = _recip(ax_safe)
    inv_ax1 = _recip(ax + 1.0)
    xr = jnp.where(big, -inv_ax, jnp.where(mid, (ax - 1.0) * inv_ax1, ax))
    bias = jnp.where(big, _PI_2, jnp.where(mid, _PI_4, 0.0))
    y = bias + _atan_poly(xr)
    return jnp.where(x < 0.0, -y, y)


def _atan2(y, x):
    x_safe = jnp.where(x != 0.0, x, 1.0)
    base = _atan(y * _recip(x_safe))
    return jnp.where(
        x > 0.0, base,
        jnp.where(x < 0.0,
                  jnp.where(y >= 0.0, base + _PI, base - _PI),
                  jnp.where(y > 0.0, _PI_2,
                            jnp.where(y < 0.0, -_PI_2, 0.0))))


def _compose(R1, t1, R2, t2):
    """(R1,t1) o (R2,t2): R = R1 R2, t = R1 t2 + t1 (lists of (1,B) arrays)."""
    R = [sum(R1[3 * i + k] * R2[3 * k + j] for k in range(3))
         for i in range(3) for j in range(3)]
    t = [sum(R1[3 * i + k] * t2[k] for k in range(3)) + t1[i] for i in range(3)]
    return R, t


# ----------------------------------------------------------------------------
# fused kernel: compose + Euler extraction + MLP + L1 losses
# ----------------------------------------------------------------------------
def forward_model_kernel(poses_ref, slab_ref, out_ref):
    poses = poses_ref[...]                        # (24, B) component-major
    B = poses.shape[1]
    Bf = float(B)

    # Batched transcendentals: 2 EUP pushes over the whole block instead of 18.
    sn = jnp.sin(poses)
    cs = jnp.cos(poses)

    def rot_t(base):
        t = [poses[base + i:base + i + 1, :] for i in range(3)]
        ca, cb, cc = (cs[base + 3:base + 4, :], cs[base + 4:base + 5, :],
                      cs[base + 5:base + 6, :])
        sa, sb, sc = (sn[base + 3:base + 4, :], sn[base + 4:base + 5, :],
                      sn[base + 5:base + 6, :])
        # R = Rz(a) @ Ry(b) @ Rx(c), row-major
        R = [ca * cb, ca * sb * sc - sa * cc, ca * sb * cc + sa * sc,
             sa * cb, sa * sb * sc + ca * cc, sa * sb * cc - ca * sc,
             -sb,     cb * sc,                cb * cc]
        return R, t

    R_Hh, t_Hh = rot_t(0)                         # pose_H_h
    R_hp, t_hp = rot_t(8)                         # pose_h_p
    R_pP, t_pP = rot_t(16)                        # pose_p_P

    R_hP, t_hP = _compose(R_hp, t_hp, R_pP, t_pP)    # tf_h_P = tf_h_p @ tf_p_P
    R_HP, t_HP = _compose(R_Hh, t_Hh, R_hP, t_hP)    # tf_H_P = tf_H_h @ tf_h_P

    # matrix -> pose (ZYX Euler extraction), ONE vectorized atan2 over (3,B).
    # TODO(synk): gimbal-lock (|b| ~= pi/2) special case of matrix->pose not handled.
    r00, r10, r20, r21, r22 = R_HP[0], R_HP[3], R_HP[6], R_HP[7], R_HP[8]
    hyp = jnp.sqrt(r00 * r00 + r10 * r10)
    ys = jnp.concatenate([r10, -r20, r21], axis=0)   # (3,B)
    xs = jnp.concatenate([r00, hyp, r22], axis=0)    # (3,B)
    euler = _atan2(ys, xs)                           # (3,B): (a, b, c)

    # MLP input, component-major (rows 0:6 = pose_H_P, row 32 = 1 for the
    # folded biases, everything else exactly 0).  Built in registers, no scratch.
    xin = jnp.concatenate(
        [t_HP[0], t_HP[1], t_HP[2], euler,
         jnp.zeros((26, B), jnp.float32),
         jnp.ones((1, B), jnp.float32),
         jnp.zeros((7, B), jnp.float32)], axis=0)    # (40, B)

    slab = slab_ref[...]                             # (88, 40) packed weights
    w1 = slab[0:AUG, :]                              # (40, 40) augmented W1^T|b1
    w2 = slab[AUG:2 * AUG, :]                        # (40, 40) augmented W2^T|b2
    w3 = slab[2 * AUG:2 * AUG + 8, :]                # ( 8, 40) augmented W3^T|b3

    # contact-manifold MLP (f32 on MXU); biases ride on the ones row (row 32).
    h1 = jnp.maximum(jnp.dot(w1, xin, preferred_element_type=jnp.float32), 0.0)
    h2 = jnp.maximum(jnp.dot(w2, h1, preferred_element_type=jnp.float32), 0.0)
    y = jnp.dot(w3, h2, preferred_element_type=jnp.float32)   # (8, B)

    # Fused L1 reductions: 2 lane-reduces + tiny sublane sums.
    diff = jnp.abs(y[0:POSE_DIM, :] - xin[0:POSE_DIM, :])     # (6, B)
    rd = jnp.sum(diff, axis=1, keepdims=True)                 # (6, 1)
    rp = jnp.sum(jnp.abs(poses), axis=1, keepdims=True)       # (24, 1)

    def colsum(c):
        return jnp.sum(c, axis=0, keepdims=True)[0, 0]

    lpos = colsum(rd[0:3, :]) / (3.0 * Bf)
    lrot = colsum(rd[3:POSE_DIM, :]) / (3.0 * Bf)
    # padding rows (6,7 and 22,23) are exactly zero, so 8-row sums are safe.
    reg = (colsum(rp[0:8, :]) + colsum(rp[16:24, :])) / (POSE_DIM * Bf)
    loss = 0.5 * (lpos + lrot) + 0.001 * reg

    out_ref[0, 0] = loss
    out_ref[0, 1] = lpos
    out_ref[0, 2] = lrot
    out_ref[0, 3] = reg


# ----------------------------------------------------------------------------
# wrapper
# ----------------------------------------------------------------------------
def make_params():
    key = jax.random.PRNGKey(123)
    k1, k2, k3, k4, k5, k6 = jax.random.split(key, 6)
    return dict(
        W1=0.3 * jax.random.normal(k1, (POSE_DIM, HID), jnp.float32),
        b1=0.05 * jax.random.normal(k2, (1, HID), jnp.float32),
        W2=0.2 * jax.random.normal(k3, (HID, HID), jnp.float32),
        b2=0.05 * jax.random.normal(k4, (1, HID), jnp.float32),
        W3=0.3 * jax.random.normal(k5, (HID, POSE_DIM), jnp.float32),
        b3=0.05 * jax.random.normal(k6, (1, POSE_DIM), jnp.float32),
    )


def pad_params_for_kernel(p):
    """Pack all weights+biases into ONE (88,40) slab, built once at init.

    Each layer is an augmented affine map over a 40-wide contraction:
      cols 0:K   = W^T, col 32 = bias (applied via the ones row of the
      activation), other cols 0.  Row 32 of the square layers is a
      passthrough (1 at [32,32]) so the ones row survives the ReLU chain.
    """
    W1a = jnp.zeros((AUG, AUG), jnp.float32)
    W1a = W1a.at[0:HID, 0:POSE_DIM].set(p["W1"].T)
    W1a = W1a.at[0:HID, HID].set(p["b1"].reshape(HID))
    W1a = W1a.at[HID, HID].set(1.0)

    W2a = jnp.zeros((AUG, AUG), jnp.float32)
    W2a = W2a.at[0:HID, 0:HID].set(p["W2"].T)
    W2a = W2a.at[0:HID, HID].set(p["b2"].reshape(HID))
    W2a = W2a.at[HID, HID].set(1.0)

    W3a = jnp.zeros((8, AUG), jnp.float32)
    W3a = W3a.at[0:POSE_DIM, 0:HID].set(p["W3"].T)
    W3a = W3a.at[0:POSE_DIM, HID].set(p["b3"].reshape(POSE_DIM))

    return jnp.concatenate([W1a, W2a, W3a], axis=0)       # (88, 40)


def forward_model_pallas(pose_H_h, pose_h_p, pose_p_P, slab):
    B = pose_h_p.shape[0]
    # Single concat + transpose: component-major (24,B) pose slab, with zero
    # padding rows 6,7 / 14,15 / 22,23 (kept zero -> safe 8-row reg sums).
    z2 = jnp.zeros((B, 2), jnp.float32)
    poses = jnp.concatenate(
        [jnp.broadcast_to(pose_H_h, (B, POSE_DIM)).astype(jnp.float32), z2,
         pose_h_p.astype(jnp.float32), z2,
         jnp.broadcast_to(pose_p_P, (B, POSE_DIM)).astype(jnp.float32), z2],
        axis=1).T                                          # (24, B)

    # NOTE: at B=8 a single grid-less invocation is optimal (latency-bound).
    # If many independent estimator instances exist (esp. on v7x with 2 TCs),
    # add a leading "parallel" grid axis or pack instances into the lane dim.
    out = pl.pallas_call(
        forward_model_kernel,
        out_shape=jax.ShapeDtypeStruct((1, 4), jnp.float32),
        in_specs=[pl.BlockSpec(memory_space=pltpu.VMEM)] * 2,
        out_specs=pl.BlockSpec(memory_space=pltpu.SMEM),
    )(poses, slab)
    return out[0, 0], out[0, 1], out[0, 2]


# ----------------------------------------------------------------------------
# Pure-JAX reference (same math, no Pallas) for a sanity check
# ----------------------------------------------------------------------------
def _pose_to_mat_ref(p):
    a, b, c = p[:, 3], p[:, 4], p[:, 5]
    ca, sa, cb, sb, cc, sc = (jnp.cos(a), jnp.sin(a), jnp.cos(b), jnp.sin(b),
                              jnp.cos(c), jnp.sin(c))
    R = jnp.stack([ca * cb, ca * sb * sc - sa * cc, ca * sb * cc + sa * sc,
                   sa * cb, sa * sb * sc + ca * cc, sa * sb * cc - ca * sc,
                   -sb, cb * sc, cb * cc], axis=-1).reshape(-1, 3, 3)
    B = p.shape[0]
    T = jnp.zeros((B, 4, 4), p.dtype)
    T = T.at[:, :3, :3].set(R).at[:, :3, 3].set(p[:, :3]).at[:, 3, 3].set(1.0)
    return T


def _mat_to_pose_ref(T):
    R, t = T[:, :3, :3], T[:, :3, 3]
    a = jnp.arctan2(R[:, 1, 0], R[:, 0, 0])
    b = jnp.arctan2(-R[:, 2, 0], jnp.sqrt(R[:, 0, 0] ** 2 + R[:, 1, 0] ** 2))
    c = jnp.arctan2(R[:, 2, 1], R[:, 2, 2])
    return jnp.concatenate([t, jnp.stack([a, b, c], axis=1)], axis=1)


def forward_model_ref(pose_H_h, pose_h_p, pose_p_P, p):
    tf_H_h = _pose_to_mat_ref(pose_H_h)
    tf_h_p = _pose_to_mat_ref(pose_h_p)
    tf_p_P = _pose_to_mat_ref(pose_p_P)
    tf_h_P = jnp.einsum("bij,bjk->bik", tf_h_p, tf_p_P)
    tf_H_P = jnp.einsum("bij,bjk->bik", tf_H_h, tf_h_P)
    pose_H_P = _mat_to_pose_ref(tf_H_P)
    h1 = jnp.maximum(pose_H_P @ p["W1"] + p["b1"], 0.0)
    h2 = jnp.maximum(h1 @ p["W2"] + p["b2"], 0.0)
    proj = h2 @ p["W3"] + p["b3"]
    reg = jnp.mean(jnp.abs(pose_H_h)) + jnp.mean(jnp.abs(pose_p_P))
    loss = jnp.mean(jnp.abs(proj - pose_H_P)) + 0.001 * reg
    lpos = jnp.mean(jnp.abs(proj[:, :3] - pose_H_P[:, :3]))
    lrot = jnp.mean(jnp.abs(proj[:, 3:] - pose_H_P[:, 3:]))
    return loss, lpos, lrot


if __name__ == "__main__":
    B = 8
    key = jax.random.PRNGKey(0)
    k1, k2, k3 = jax.random.split(key, 3)
    # small translations / rotations (radians)
    pose_H_h = (0.1 * jax.random.normal(k1, (B, 6))).astype(jnp.float32)
    pose_h_p = (0.2 * jax.random.normal(k2, (B, 6))).astype(jnp.float32)
    pose_p_P = (0.1 * jax.random.normal(k3, (B, 6))).astype(jnp.float32)

    params = make_params()
    slab = jax.block_until_ready(pad_params_for_kernel(params))  # hoisted: once

    fwd = jax.jit(lambda a, b, c: forward_model_pallas(a, b, c, slab))
    loss, lpos, lrot = fwd(pose_H_h, pose_h_p, pose_p_P)
    jax.block_until_ready((loss, lpos, lrot))

    ref = forward_model_ref(pose_H_h, pose_h_p, pose_p_P, params)
    np.testing.assert_allclose(np.array([loss, lpos, lrot]),
                               np.array(ref), rtol=1e-3, atol=1e-3)

    print("KERNEL_OK")
</pallas_src>

<mosaic_0001>
module attributes {stable_mosaic.version = 11 : i64} {
  func.func @forward_model_kernel(%arg0: memref<24x8xf32, #tpu.memory_space<vmem>>, %arg1: memref<88x40xf32, #tpu.memory_space<vmem>>, %arg2: memref<1x4xf32, #tpu.memory_space<smem>>) attributes {dimension_semantics = [], scalar_prefetch = 0 : i64, scratch_operands = 0 : i64, tpu.core_type = #tpu.core_type<tc>} {
    %c0 = arith.constant 0 : index
    %c0_0 = arith.constant 0 : index
    %0 = vector.load %arg0[%c0, %c0_0] : memref<24x8xf32, #tpu.memory_space<vmem>>, vector<24x8xf32>
    %1 = math.sin %0 : vector<24x8xf32>
    %2 = math.cos %0 : vector<24x8xf32>
    %3 = vector.extract_strided_slice %0 {offsets = [0, 0], sizes = [1, 8], strides = [1, 1]} : vector<24x8xf32> to vector<1x8xf32>
    %4 = vector.extract_strided_slice %0 {offsets = [1, 0], sizes = [1, 8], strides = [1, 1]} : vector<24x8xf32> to vector<1x8xf32>
    %5 = vector.extract_strided_slice %0 {offsets = [2, 0], sizes = [1, 8], strides = [1, 1]} : vector<24x8xf32> to vector<1x8xf32>
    %6 = vector.extract_strided_slice %2 {offsets = [3, 0], sizes = [1, 8], strides = [1, 1]} : vector<24x8xf32> to vector<1x8xf32>
    %7 = vector.extract_strided_slice %2 {offsets = [4, 0], sizes = [1, 8], strides = [1, 1]} : vector<24x8xf32> to vector<1x8xf32>
    %8 = vector.extract_strided_slice %2 {offsets = [5, 0], sizes = [1, 8], strides = [1, 1]} : vector<24x8xf32> to vector<1x8xf32>
    %9 = vector.extract_strided_slice %1 {offsets = [3, 0], sizes = [1, 8], strides = [1, 1]} : vector<24x8xf32> to vector<1x8xf32>
    %10 = vector.extract_strided_slice %1 {offsets = [4, 0], sizes = [1, 8], strides = [1, 1]} : vector<24x8xf32> to vector<1x8xf32>
    %11 = vector.extract_strided_slice %1 {offsets = [5, 0], sizes = [1, 8], strides = [1, 1]} : vector<24x8xf32> to vector<1x8xf32>
    %12 = arith.mulf %6, %7 : vector<1x8xf32>
    %13 = arith.mulf %6, %10 : vector<1x8xf32>
    %14 = arith.mulf %13, %11 : vector<1x8xf32>
    %15 = arith.mulf %9, %8 : vector<1x8xf32>
    %16 = arith.subf %14, %15 : vector<1x8xf32>
    %17 = arith.mulf %6, %10 : vector<1x8xf32>
    %18 = arith.mulf %17, %8 : vector<1x8xf32>
    %19 = arith.mulf %9, %11 : vector<1x8xf32>
    %20 = arith.addf %18, %19 : vector<1x8xf32>
    %21 = arith.mulf %9, %7 : vector<1x8xf32>
    %22 = arith.mulf %9, %10 : vector<1x8xf32>
    %23 = arith.mulf %22, %11 : vector<1x8xf32>
    %24 = arith.mulf %6, %8 : vector<1x8xf32>
    %25 = arith.addf %23, %24 : vector<1x8xf32>
    %26 = arith.mulf %9, %10 : vector<1x8xf32>
    %27 = arith.mulf %26, %8 : vector<1x8xf32>
    %28 = arith.mulf %6, %11 : vector<1x8xf32>
    %29 = arith.subf %27, %28 : vector<1x8xf32>
    %cst = arith.constant 0.000000e+00 : f32
    %30 = vector.broadcast %cst : f32 to vector<1x8xf32>
    %31 = arith.subf %30, %10 : vector<1x8xf32>
    %32 = arith.mulf %7, %11 : vector<1x8xf32>
    %33 = arith.mulf %7, %8 : vector<1x8xf32>
    %34 = vector.extract_strided_slice %0 {offsets = [8, 0], sizes = [1, 8], strides = [1, 1]} : vector<24x8xf32> to vector<1x8xf32>
    %35 = vector.extract_strided_slice %0 {offsets = [9, 0], sizes = [1, 8], strides = [1, 1]} : vector<24x8xf32> to vector<1x8xf32>
    %36 = vector.extract_strided_slice %0 {offsets = [10, 0], sizes = [1, 8], strides = [1, 1]} : vector<24x8xf32> to vector<1x8xf32>
    %37 = vector.extract_strided_slice %2 {offsets = [11, 0], sizes = [1, 8], strides = [1, 1]} : vector<24x8xf32> to vector<1x8xf32>
    %38 = vector.extract_strided_slice %2 {offsets = [12, 0], sizes = [1, 8], strides = [1, 1]} : vector<24x8xf32> to vector<1x8xf32>
    %39 = vector.extract_strided_slice %2 {offsets = [13, 0], sizes = [1, 8], strides = [1, 1]} : vector<24x8xf32> to vector<1x8xf32>
    %40 = vector.extract_strided_slice %1 {offsets = [11, 0], sizes = [1, 8], strides = [1, 1]} : vector<24x8xf32> to vector<1x8xf32>
    %41 = vector.extract_strided_slice %1 {offsets = [12, 0], sizes = [1, 8], strides = [1, 1]} : vector<24x8xf32> to vector<1x8xf32>
    %42 = vector.extract_strided_slice %1 {offsets = [13, 0], sizes = [1, 8], strides = [1, 1]} : vector<24x8xf32> to vector<1x8xf32>
    %43 = arith.mulf %37, %38 : vector<1x8xf32>
    %44 = arith.mulf %37, %41 : vector<1x8xf32>
    %45 = arith.mulf %44, %42 : vector<1x8xf32>
    %46 = arith.mulf %40, %39 : vector<1x8xf32>
    %47 = arith.subf %45, %46 : vector<1x8xf32>
    %48 = arith.mulf %37, %41 : vector<1x8xf32>
    %49 = arith.mulf %48, %39 : vector<1x8xf32>
    %50 = arith.mulf %40, %42 : vector<1x8xf32>
    %51 = arith.addf %49, %50 : vector<1x8xf32>
    %52 = arith.mulf %40, %38 : vector<1x8xf32>
    %53 = arith.mulf %40, %41 : vector<1x8xf32>
    %54 = arith.mulf %53, %42 : vector<1x8xf32>
    %55 = arith.mulf %37, %39 : vector<1x8xf32>
    %56 = arith.addf %54, %55 : vector<1x8xf32>
    %57 = arith.mulf %40, %41 : vector<1x8xf32>
    %58 = arith.mulf %57, %39 : vector<1x8xf32>
    %59 = arith.mulf %37, %42 : vector<1x8xf32>
    %60 = arith.subf %58, %59 : vector<1x8xf32>
    %cst_1 = arith.constant 0.000000e+00 : f32
    %61 = vector.broadcast %cst_1 : f32 to vector<1x8xf32>
    %62 = arith.subf %61, %41 : vector<1x8xf32>
    %63 = arith.mulf %38, %42 : vector<1x8xf32>
    %64 = arith.mulf %38, %39 : vector<1x8xf32>
    %65 = vector.extract_strided_slice %0 {offsets = [16, 0], sizes = [1, 8], strides = [1, 1]} : vector<24x8xf32> to vector<1x8xf32>
    %66 = vector.extract_strided_slice %0 {offsets = [17, 0], sizes = [1, 8], strides = [1, 1]} : vector<24x8xf32> to vector<1x8xf32>
    %67 = vector.extract_strided_slice %0 {offsets = [18, 0], sizes = [1, 8], strides = [1, 1]} : vector<24x8xf32> to vector<1x8xf32>
    %68 = vector.extract_strided_slice %2 {offsets = [19, 0], sizes = [1, 8], strides = [1, 1]} : vector<24x8xf32> to vector<1x8xf32>
    %69 = vector.extract_strided_slice %2 {offsets = [20, 0], sizes = [1, 8], strides = [1, 1]} : vector<24x8xf32> to vector<1x8xf32>
    %70 = vector.extract_strided_slice %2 {offsets = [21, 0], sizes = [1, 8], strides = [1, 1]} : vector<24x8xf32> to vector<1x8xf32>
    %71 = vector.extract_strided_slice %1 {offsets = [19, 0], sizes = [1, 8], strides = [1, 1]} : vector<24x8xf32> to vector<1x8xf32>
    %72 = vector.extract_strided_slice %1 {offsets = [20, 0], sizes = [1, 8], strides = [1, 1]} : vector<24x8xf32> to vector<1x8xf32>
    %73 = vector.extract_strided_slice %1 {offsets = [21, 0], sizes = [1, 8], strides = [1, 1]} : vector<24x8xf32> to vector<1x8xf32>
    %74 = arith.mulf %68, %69 : vector<1x8xf32>
    %75 = arith.mulf %68, %72 : vector<1x8xf32>
    %76 = arith.mulf %75, %73 : vector<1x8xf32>
    %77 = arith.mulf %71, %70 : vector<1x8xf32>
    %78 = arith.subf %76, %77 : vector<1x8xf32>
    %79 = arith.mulf %68, %72 : vector<1x8xf32>
    %80 = arith.mulf %79, %70 : vector<1x8xf32>
    %81 = arith.mulf %71, %73 : vector<1x8xf32>
    %82 = arith.addf %80, %81 : vector<1x8xf32>
    %83 = arith.mulf %71, %69 : vector<1x8xf32>
    %84 = arith.mulf %71, %72 : vector<1x8xf32>
    %85 = arith.mulf %84, %73 : vector<1x8xf32>
    %86 = arith.mulf %68, %70 : vector<1x8xf32>
    %87 = arith.addf %85, %86 : vector<1x8xf32>
    %88 = arith.mulf %71, %72 : vector<1x8xf32>
    %89 = arith.mulf %88, %70 : vector<1x8xf32>
    %90 = arith.mulf %68, %73 : vector<1x8xf32>
    %91 = arith.subf %89, %90 : vector<1x8xf32>
    %cst_2 = arith.constant 0.000000e+00 : f32
    %92 = vector.broadcast %cst_2 : f32 to vector<1x8xf32>
    %93 = arith.subf %92, %72 : vector<1x8xf32>
    %94 = arith.mulf %69, %73 : vector<1x8xf32>
    %95 = arith.mulf %69, %70 : vector<1x8xf32>
    %96 = arith.mulf %43, %74 : vector<1x8xf32>
    %cst_3 = arith.constant 0.000000e+00 : f32
    %97 = vector.broadcast %cst_3 : f32 to vector<1x8xf32>
    %98 = arith.addf %97, %96 : vector<1x8xf32>
    %99 = arith.mulf %47, %83 : vector<1x8xf32>
    %100 = arith.addf %98, %99 : vector<1x8xf32>
    %101 = arith.mulf %51, %93 : vector<1x8xf32>
    %102 = arith.addf %100, %101 : vector<1x8xf32>
    %103 = arith.mulf %43, %78 : vector<1x8xf32>
    %cst_4 = arith.constant 0.000000e+00 : f32
    %104 = vector.broadcast %cst_4 : f32 to vector<1x8xf32>
    %105 = arith.addf %104, %103 : vector<1x8xf32>
    %106 = arith.mulf %47, %87 : vector<1x8xf32>
    %107 = arith.addf %105, %106 : vector<1x8xf32>
    %108 = arith.mulf %51, %94 : vector<1x8xf32>
    %109 = arith.addf %107, %108 : vector<1x8xf32>
    %110 = arith.mulf %43, %82 : vector<1x8xf32>
    %cst_5 = arith.constant 0.000000e+00 : f32
    %111 = vector.broadcast %cst_5 : f32 to vector<1x8xf32>
    %112 = arith.addf %111, %110 : vector<1x8xf32>
    %113 = arith.mulf %47, %91 : vector<1x8xf32>
    %114 = arith.addf %112, %113 : vector<1x8xf32>
    %115 = arith.mulf %51, %95 : vector<1x8xf32>
    %116 = arith.addf %114, %115 : vector<1x8xf32>
    %117 = arith.mulf %52, %74 : vector<1x8xf32>
    %cst_6 = arith.constant 0.000000e+00 : f32
    %118 = vector.broadcast %cst_6 : f32 to vector<1x8xf32>
    %119 = arith.addf %118, %117 : vector<1x8xf32>
    %120 = arith.mulf %56, %83 : vector<1x8xf32>
    %121 = arith.addf %119, %120 : vector<1x8xf32>
    %122 = arith.mulf %60, %93 : vector<1x8xf32>
    %123 = arith.addf %121, %122 : vector<1x8xf32>
    %124 = arith.mulf %52, %78 : vector<1x8xf32>
    %cst_7 = arith.constant 0.000000e+00 : f32
    %125 = vector.broadcast %cst_7 : f32 to vector<1x8xf32>
    %126 = arith.addf %125, %124 : vector<1x8xf32>
    %127 = arith.mulf %56, %87 : vector<1x8xf32>
    %128 = arith.addf %126, %127 : vector<1x8xf32>
    %129 = arith.mulf %60, %94 : vector<1x8xf32>
    %130 = arith.addf %128, %129 : vector<1x8xf32>
    %131 = arith.mulf %52, %82 : vector<1x8xf32>
    %cst_8 = arith.constant 0.000000e+00 : f32
    %132 = vector.broadcast %cst_8 : f32 to vector<1x8xf32>
    %133 = arith.addf %132, %131 : vector<1x8xf32>
    %134 = arith.mulf %56, %91 : vector<1x8xf32>
    %135 = arith.addf %133, %134 : vector<1x8xf32>
    %136 = arith.mulf %60, %95 : vector<1x8xf32>
    %137 = arith.addf %135, %136 : vector<1x8xf32>
    %138 = arith.mulf %62, %74 : vector<1x8xf32>
    %cst_9 = arith.constant 0.000000e+00 : f32
    %139 = vector.broadcast %cst_9 : f32 to vector<1x8xf32>
    %140 = arith.addf %139, %138 : vector<1x8xf32>
    %141 = arith.mulf %63, %83 : vector<1x8xf32>
    %142 = arith.addf %140, %141 : vector<1x8xf32>
    %143 = arith.mulf %64, %93 : vector<1x8xf32>
    %144 = arith.addf %142, %143 : vector<1x8xf32>
    %145 = arith.mulf %62, %78 : vector<1x8xf32>
    %cst_10 = arith.constant 0.000000e+00 : f32
    %146 = vector.broadcast %cst_10 : f32 to vector<1x8xf32>
    %147 = arith.addf %146, %145 : vector<1x8xf32>
    %148 = arith.mulf %63, %87 : vector<1x8xf32>
    %149 = arith.addf %147, %148 : vector<1x8xf32>
    %150 = arith.mulf %64, %94 : vector<1x8xf32>
    %151 = arith.addf %149, %150 : vector<1x8xf32>
    %152 = arith.mulf %62, %82 : vector<1x8xf32>
    %cst_11 = arith.constant 0.000000e+00 : f32
    %153 = vector.broadcast %cst_11 : f32 to vector<1x8xf32>
    %154 = arith.addf %153, %152 : vector<1x8xf32>
    %155 = arith.mulf %63, %91 : vector<1x8xf32>
    %156 = arith.addf %154, %155 : vector<1x8xf32>
    %157 = arith.mulf %64, %95 : vector<1x8xf32>
    %158 = arith.addf %156, %157 : vector<1x8xf32>
    %159 = arith.mulf %43, %65 : vector<1x8xf32>
    %cst_12 = arith.constant 0.000000e+00 : f32
    %160 = vector.broadcast %cst_12 : f32 to vector<1x8xf32>
    %161 = arith.addf %160, %159 : vector<1x8xf32>
    %162 = arith.mulf %47, %66 : vector<1x8xf32>
    %163 = arith.addf %161, %162 : vector<1x8xf32>
    %164 = arith.mulf %51, %67 : vector<1x8xf32>
    %165 = arith.addf %163, %164 : vector<1x8xf32>
    %166 = arith.addf %165, %34 : vector<1x8xf32>
    %167 = arith.mulf %52, %65 : vector<1x8xf32>
    %cst_13 = arith.constant 0.000000e+00 : f32
    %168 = vector.broadcast %cst_13 : f32 to vector<1x8xf32>
    %169 = arith.addf %168, %167 : vector<1x8xf32>
    %170 = arith.mulf %56, %66 : vector<1x8xf32>
    %171 = arith.addf %169, %170 : vector<1x8xf32>
    %172 = arith.mulf %60, %67 : vector<1x8xf32>
    %173 = arith.addf %171, %172 : vector<1x8xf32>
    %174 = arith.addf %173, %35 : vector<1x8xf32>
    %175 = arith.mulf %62, %65 : vector<1x8xf32>
    %cst_14 = arith.constant 0.000000e+00 : f32
    %176 = vector.broadcast %cst_14 : f32 to vector<1x8xf32>
    %177 = arith.addf %176, %175 : vector<1x8xf32>
    %178 = arith.mulf %63, %66 : vector<1x8xf32>
    %179 = arith.addf %177, %178 : vector<1x8xf32>
    %180 = arith.mulf %64, %67 : vector<1x8xf32>
    %181 = arith.addf %179, %180 : vector<1x8xf32>
    %182 = arith.addf %181, %36 : vector<1x8xf32>
    %183 = arith.mulf %12, %102 : vector<1x8xf32>
    %cst_15 = arith.constant 0.000000e+00 : f32
    %184 = vector.broadcast %cst_15 : f32 to vector<1x8xf32>
    %185 = arith.addf %184, %183 : vector<1x8xf32>
    %186 = arith.mulf %16, %123 : vector<1x8xf32>
    %187 = arith.addf %185, %186 : vector<1x8xf32>
    %188 = arith.mulf %20, %144 : vector<1x8xf32>
    %189 = arith.addf %187, %188 : vector<1x8xf32>
    %190 = arith.mulf %21, %102 : vector<1x8xf32>
    %cst_16 = arith.constant 0.000000e+00 : f32
    %191 = vector.broadcast %cst_16 : f32 to vector<1x8xf32>
    %192 = arith.addf %191, %190 : vector<1x8xf32>
    %193 = arith.mulf %25, %123 : vector<1x8xf32>
    %194 = arith.addf %192, %193 : vector<1x8xf32>
    %195 = arith.mulf %29, %144 : vector<1x8xf32>
    %196 = arith.addf %194, %195 : vector<1x8xf32>
    %197 = arith.mulf %31, %102 : vector<1x8xf32>
    %cst_17 = arith.constant 0.000000e+00 : f32
    %198 = vector.broadcast %cst_17 : f32 to vector<1x8xf32>
    %199 = arith.addf %198, %197 : vector<1x8xf32>
    %200 = arith.mulf %32, %123 : vector<1x8xf32>
    %201 = arith.addf %199, %200 : vector<1x8xf32>
    %202 = arith.mulf %33, %144 : vector<1x8xf32>
    %203 = arith.addf %201, %202 : vector<1x8xf32>
    %204 = arith.mulf %31, %109 : vector<1x8xf32>
    %cst_18 = arith.constant 0.000000e+00 : f32
    %205 = vector.broadcast %cst_18 : f32 to vector<1x8xf32>
    %206 = arith.addf %205, %204 : vector<1x8xf32>
    %207 = arith.mulf %32, %130 : vector<1x8xf32>
    %208 = arith.addf %206, %207 : vector<1x8xf32>
    %209 = arith.mulf %33, %151 : vector<1x8xf32>
    %210 = arith.addf %208, %209 : vector<1x8xf32>
    %211 = arith.mulf %31, %116 : vector<1x8xf32>
    %cst_19 = arith.constant 0.000000e+00 : f32
    %212 = vector.broadcast %cst_19 : f32 to vector<1x8xf32>
    %213 = arith.addf %212, %211 : vector<1x8xf32>
    %214 = arith.mulf %32, %137 : vector<1x8xf32>
    %215 = arith.addf %213, %214 : vector<1x8xf32>
    %216 = arith.mulf %33, %158 : vector<1x8xf32>
    %217 = arith.addf %215, %216 : vector<1x8xf32>
    %218 = arith.mulf %12, %166 : vector<1x8xf32>
    %cst_20 = arith.constant 0.000000e+00 : f32
    %219 = vector.broadcast %cst_20 : f32 to vector<1x8xf32>
    %220 = arith.addf %219, %218 : vector<1x8xf32>
    %221 = arith.mulf %16, %174 : vector<1x8xf32>
    %222 = arith.addf %220, %221 : vector<1x8xf32>
    %223 = arith.mulf %20, %182 : vector<1x8xf32>
    %224 = arith.addf %222, %223 : vector<1x8xf32>
    %225 = arith.addf %224, %3 : vector<1x8xf32>
    %226 = arith.mulf %21, %166 : vector<1x8xf32>
    %cst_21 = arith.constant 0.000000e+00 : f32
    %227 = vector.broadcast %cst_21 : f32 to vector<1x8xf32>
    %228 = arith.addf %227, %226 : vector<1x8xf32>
    %229 = arith.mulf %25, %174 : vector<1x8xf32>
    %230 = arith.addf %228, %229 : vector<1x8xf32>
    %231 = arith.mulf %29, %182 : vector<1x8xf32>
    %232 = arith.addf %230, %231 : vector<1x8xf32>
    %233 = arith.addf %232, %4 : vector<1x8xf32>
    %234 = arith.mulf %31, %166 : vector<1x8xf32>
    %cst_22 = arith.constant 0.000000e+00 : f32
    %235 = vector.broadcast %cst_22 : f32 to vector<1x8xf32>
    %236 = arith.addf %235, %234 : vector<1x8xf32>
    %237 = arith.mulf %32, %174 : vector<1x8xf32>
    %238 = arith.addf %236, %237 : vector<1x8xf32>
    %239 = arith.mulf %33, %182 : vector<1x8xf32>
    %240 = arith.addf %238, %239 : vector<1x8xf32>
    %241 = arith.addf %240, %5 : vector<1x8xf32>
    %242 = arith.mulf %189, %189 : vector<1x8xf32>
    %243 = arith.mulf %196, %196 : vector<1x8xf32>
    %244 = arith.addf %242, %243 : vector<1x8xf32>
    %245 = math.sqrt %244 : vector<1x8xf32>
    %cst_23 = arith.constant 0.000000e+00 : f32
    %246 = vector.broadcast %cst_23 : f32 to vector<1x8xf32>
    %247 = arith.subf %246, %203 : vector<1x8xf32>
    %248 = tpu.concatenate %196, %247, %210 in 0 : vector<1x8xf32>, vector<1x8xf32>, vector<1x8xf32> -> vector<3x8xf32>
    %249 = tpu.concatenate %189, %245, %217 in 0 : vector<1x8xf32>, vector<1x8xf32>, vector<1x8xf32> -> vector<3x8xf32>
    %cst_24 = arith.constant 0.000000e+00 : f32
    %250 = vector.broadcast %cst_24 : f32 to vector<3x8xf32>
    %251 = arith.cmpf one, %249, %250 : vector<3x8xf32>
    %cst_25 = arith.constant 1.000000e+00 : f32
    %252 = vector.broadcast %cst_25 : f32 to vector<3x8xf32>
    %253 = arith.select %251, %249, %252 : vector<3x8xi1>, vector<3x8xf32>
    %254 = tpu.reciprocal %253 {approx = true} : vector<3x8xf32> -> vector<3x8xf32>
    %255 = arith.mulf %253, %254 : vector<3x8xf32>
    %cst_26 = arith.constant 2.000000e+00 : f32
    %256 = vector.broadcast %cst_26 : f32 to vector<3x8xf32>
    %257 = arith.subf %256, %255 : vector<3x8xf32>
    %258 = arith.mulf %254, %257 : vector<3x8xf32>
    %259 = arith.mulf %248, %258 : vector<3x8xf32>
    %260 = math.absf %259 : vector<3x8xf32>
    %cst_27 = arith.constant 2.41421366 : f32
    %261 = vector.broadcast %cst_27 : f32 to vector<3x8xf32>
    %262 = arith.cmpf ogt, %260, %261 : vector<3x8xf32>
    %cst_28 = arith.constant 0.414213568 : f32
    %263 = vector.broadcast %cst_28 : f32 to vector<3x8xf32>
    %264 = arith.cmpf ogt, %260, %263 : vector<3x8xf32>
    %cst_29 = arith.constant dense<true> : vector<3x8xi1>
    %265 = arith.xori %262, %cst_29 : vector<3x8xi1>
    %266 = arith.andi %264, %265 : vector<3x8xi1>
    %cst_30 = arith.constant 0.000000e+00 : f32
    %267 = vector.broadcast %cst_30 : f32 to vector<3x8xf32>
    %268 = arith.cmpf ogt, %260, %267 : vector<3x8xf32>
    %cst_31 = arith.constant 1.000000e+00 : f32
    %269 = vector.broadcast %cst_31 : f32 to vector<3x8xf32>
    %270 = arith.select %268, %260, %269 : vector<3x8xi1>, vector<3x8xf32>
    %271 = tpu.reciprocal %270 {approx = true} : vector<3x8xf32> -> vector<3x8xf32>
    %272 = arith.mulf %270, %271 : vector<3x8xf32>
    %cst_32 = arith.constant 2.000000e+00 : f32
    %273 = vector.broadcast %cst_32 : f32 to vector<3x8xf32>
    %274 = arith.subf %273, %272 : vector<3x8xf32>
    %275 = arith.mulf %271, %274 : vector<3x8xf32>
    %cst_33 = arith.constant 1.000000e+00 : f32
    %276 = vector.broadcast %cst_33 : f32 to vector<3x8xf32>
    %277 = arith.addf %260, %276 : vector<3x8xf32>
    %278 = tpu.reciprocal %277 {approx = true} : vector<3x8xf32> -> vector<3x8xf32>
    %279 = arith.mulf %277, %278 : vector<3x8xf32>
    %cst_34 = arith.constant 2.000000e+00 : f32
    %280 = vector.broadcast %cst_34 : f32 to vector<3x8xf32>
    %281 = arith.subf %280, %279 : vector<3x8xf32>
    %282 = arith.mulf %278, %281 : vector<3x8xf32>
    %cst_35 = arith.constant 0.000000e+00 : f32
    %283 = vector.broadcast %cst_35 : f32 to vector<3x8xf32>
    %284 = arith.subf %283, %275 : vector<3x8xf32>
    %cst_36 = arith.constant 1.000000e+00 : f32
    %285 = vector.broadcast %cst_36 : f32 to vector<3x8xf32>
    %286 = arith.subf %260, %285 : vector<3x8xf32>
    %287 = arith.mulf %286, %282 : vector<3x8xf32>
    %288 = arith.select %266, %287, %260 : vector<3x8xi1>, vector<3x8xf32>
    %289 = arith.select %262, %284, %288 : vector<3x8xi1>, vector<3x8xf32>
    %cst_37 = arith.constant 0.785398185 : f32
    %cst_38 = arith.constant 0.000000e+00 : f32
    %290 = vector.broadcast %cst_37 : f32 to vector<3x8xf32>
    %291 = vector.broadcast %cst_38 : f32 to vector<3x8xf32>
    %292 = arith.select %266, %290, %291 : vector<3x8xi1>, vector<3x8xf32>
    %cst_39 = arith.constant 1.57079637 : f32
    %293 = vector.broadcast %cst_39 : f32 to vector<3x8xf32>
    %294 = arith.select %262, %293, %292 : vector<3x8xi1>, vector<3x8xf32>
    %295 = arith.mulf %289, %289 : vector<3x8xf32>
    %cst_40 = arith.constant 0.0805374458 : f32
    %296 = vector.broadcast %cst_40 : f32 to vector<3x8xf32>
    %297 = arith.mulf %296, %295 : vector<3x8xf32>
    %cst_41 = arith.constant 0.138776854 : f32
    %298 = vector.broadcast %cst_41 : f32 to vector<3x8xf32>
    %299 = arith.subf %297, %298 : vector<3x8xf32>
    %300 = arith.mulf %299, %295 : vector<3x8xf32>
    %cst_42 = arith.constant 0.199777111 : f32
    %301 = vector.broadcast %cst_42 : f32 to vector<3x8xf32>
    %302 = arith.addf %300, %301 : vector<3x8xf32>
    %303 = arith.mulf %302, %295 : vector<3x8xf32>
    %cst_43 = arith.constant 0.333329499 : f32
    %304 = vector.broadcast %cst_43 : f32 to vector<3x8xf32>
    %305 = arith.subf %303, %304 : vector<3x8xf32>
    %306 = arith.mulf %305, %295 : vector<3x8xf32>
    %307 = arith.mulf %306, %289 : vector<3x8xf32>
    %308 = arith.addf %307, %289 : vector<3x8xf32>
    %309 = arith.addf %294, %308 : vector<3x8xf32>
    %cst_44 = arith.constant 0.000000e+00 : f32
    %310 = vector.broadcast %cst_44 : f32 to vector<3x8xf32>
    %311 = arith.cmpf olt, %259, %310 : vector<3x8xf32>
    %cst_45 = arith.constant 0.000000e+00 : f32
    %312 = vector.broadcast %cst_45 : f32 to vector<3x8xf32>
    %313 = arith.subf %312, %309 : vector<3x8xf32>
    %314 = arith.select %311, %313, %309 : vector<3x8xi1>, vector<3x8xf32>
    %cst_46 = arith.constant 0.000000e+00 : f32
    %315 = vector.broadcast %cst_46 : f32 to vector<3x8xf32>
    %316 = arith.cmpf ogt, %249, %315 : vector<3x8xf32>
    %cst_47 = arith.constant 0.000000e+00 : f32
    %317 = vector.broadcast %cst_47 : f32 to vector<3x8xf32>
    %318 = arith.cmpf olt, %249, %317 : vector<3x8xf32>
    %cst_48 = arith.constant 0.000000e+00 : f32
    %319 = vector.broadcast %cst_48 : f32 to vector<3x8xf32>
    %320 = arith.cmpf oge, %248, %319 : vector<3x8xf32>
    %cst_49 = arith.constant 3.14159274 : f32
    %321 = vector.broadcast %cst_49 : f32 to vector<3x8xf32>
    %322 = arith.addf %314, %321 : vector<3x8xf32>
    %cst_50 = arith.constant 3.14159274 : f32
    %323 = vector.broadcast %cst_50 : f32 to vector<3x8xf32>
    %324 = arith.subf %314, %323 : vector<3x8xf32>
    %325 = arith.select %320, %322, %324 : vector<3x8xi1>, vector<3x8xf32>
    %cst_51 = arith.constant 0.000000e+00 : f32
    %326 = vector.broadcast %cst_51 : f32 to vector<3x8xf32>
    %327 = arith.cmpf ogt, %248, %326 : vector<3x8xf32>
    %cst_52 = arith.constant 0.000000e+00 : f32
    %328 = vector.broadcast %cst_52 : f32 to vector<3x8xf32>
    %329 = arith.cmpf olt, %248, %328 : vector<3x8xf32>
    %cst_53 = arith.constant -1.57079637 : f32
    %cst_54 = arith.constant 0.000000e+00 : f32
    %330 = vector.broadcast %cst_53 : f32 to vector<3x8xf32>
    %331 = vector.broadcast %cst_54 : f32 to vector<3x8xf32>
    %332 = arith.select %329, %330, %331 : vector<3x8xi1>, vector<3x8xf32>
    %cst_55 = arith.constant 1.57079637 : f32
    %333 = vector.broadcast %cst_55 : f32 to vector<3x8xf32>
    %334 = arith.select %327, %333, %332 : vector<3x8xi1>, vector<3x8xf32>
    %335 = arith.select %318, %325, %334 : vector<3x8xi1>, vector<3x8xf32>
    %336 = arith.select %316, %314, %335 : vector<3x8xi1>, vector<3x8xf32>
    %cst_56 = arith.constant 0.000000e+00 : f32
    %337 = vector.broadcast %cst_56 : f32 to vector<26x8xf32>
    %cst_57 = arith.constant 1.000000e+00 : f32
    %338 = vector.broadcast %cst_57 : f32 to vector<1x8xf32>
    %cst_58 = arith.constant 0.000000e+00 : f32
    %339 = vector.broadcast %cst_58 : f32 to vector<7x8xf32>
    %340 = tpu.concatenate %225, %233, %241, %336, %337, %338, %339 in 0 : vector<1x8xf32>, vector<1x8xf32>, vector<1x8xf32>, vector<3x8xf32>, vector<26x8xf32>, vector<1x8xf32>, vector<7x8xf32> -> vector<40x8xf32>
    %c0_59 = arith.constant 0 : index
    %c0_60 = arith.constant 0 : index
    %341 = vector.load %arg1[%c0_59, %c0_60] : memref<88x40xf32, #tpu.memory_space<vmem>>, vector<88x40xf32>
    %342 = vector.extract_strided_slice %341 {offsets = [0, 0], sizes = [40, 40], strides = [1, 1]} : vector<88x40xf32> to vector<40x40xf32>
    %343 = vector.extract_strided_slice %341 {offsets = [40, 0], sizes = [40, 40], strides = [1, 1]} : vector<88x40xf32> to vector<40x40xf32>
    %344 = vector.extract_strided_slice %341 {offsets = [80, 0], sizes = [8, 40], strides = [1, 1]} : vector<88x40xf32> to vector<8x40xf32>
    %cst_61 = arith.constant dense<0.000000e+00> : vector<40x8xf32>
    %345 = tpu.matmul %342, %340, %cst_61 {dimension_numbers = #tpu.dot_dimension_numbers<[1], [0], [0], [1], [0, 0, 1, 1], [], []>} : vector<40x40xf32>, vector<40x8xf32>, vector<40x8xf32> -> vector<40x8xf32>
    %cst_62 = arith.constant 0.000000e+00 : f32
    %346 = vector.broadcast %cst_62 : f32 to vector<40x8xf32>
    %347 = arith.maximumf %345, %346 : vector<40x8xf32>
    %cst_63 = arith.constant dense<0.000000e+00> : vector<40x8xf32>
    %348 = tpu.matmul %343, %347, %cst_63 {dimension_numbers = #tpu.dot_dimension_numbers<[1], [0], [0], [1], [0, 0, 1, 1], [], []>} : vector<40x40xf32>, vector<40x8xf32>, vector<40x8xf32> -> vector<40x8xf32>
    %cst_64 = arith.constant 0.000000e+00 : f32
    %349 = vector.broadcast %cst_64 : f32 to vector<40x8xf32>
    %350 = arith.maximumf %348, %349 : vector<40x8xf32>
    %cst_65 = arith.constant dense<0.000000e+00> : vector<8x8xf32>
    %351 = tpu.matmul %344, %350, %cst_65 {dimension_numbers = #tpu.dot_dimension_numbers<[1], [0], [0], [1], [0, 0, 1, 1], [], []>} : vector<8x40xf32>, vector<40x8xf32>, vector<8x8xf32> -> vector<8x8xf32>
    %352 = vector.extract_strided_slice %351 {offsets = [0, 0], sizes = [6, 8], strides = [1, 1]} : vector<8x8xf32> to vector<6x8xf32>
    %353 = vector.extract_strided_slice %340 {offsets = [0, 0], sizes = [6, 8], strides = [1, 1]} : vector<40x8xf32> to vector<6x8xf32>
    %354 = arith.subf %352, %353 : vector<6x8xf32>
    %355 = math.absf %354 : vector<6x8xf32>
    %cst_66 = arith.constant dense<0.000000e+00> : vector<6xf32>
    %356 = vector.multi_reduction <add>, %355, %cst_66 [1] : vector<6x8xf32> to vector<6xf32>
    %357 = vector.shape_cast %356 : vector<6xf32> to vector<6x1xf32>
    %358 = math.absf %0 : vector<24x8xf32>
    %cst_67 = arith.constant dense<0.000000e+00> : vector<24xf32>
    %359 = vector.multi_reduction <add>, %358, %cst_67 [1] : vector<24x8xf32> to vector<24xf32>
    %360 = vector.shape_cast %359 : vector<24xf32> to vector<24x1xf32>
    %361 = vector.extract_strided_slice %357 {offsets = [0, 0], sizes = [3, 1], strides = [1, 1]} : vector<6x1xf32> to vector<3x1xf32>
    %cst_68 = arith.constant dense<0.000000e+00> : vector<1xf32>
    %362 = vector.multi_reduction <add>, %361, %cst_68 [0] : vector<3x1xf32> to vector<1xf32>
    %363 = vector.shape_cast %362 : vector<1xf32> to vector<1x1xf32>
    %364 = vector.extract %363[0, 0] : f32 from vector<1x1xf32>
    %cst_69 = arith.constant 2.400000e+01 : f32
    %365 = arith.divf %364, %cst_69 : f32
    %366 = vector.extract_strided_slice %357 {offsets = [3, 0], sizes = [3, 1], strides = [1, 1]} : vector<6x1xf32> to vector<3x1xf32>
    %cst_70 = arith.constant dense<0.000000e+00> : vector<1xf32>
    %367 = vector.multi_reduction <add>, %366, %cst_70 [0] : vector<3x1xf32> to vector<1xf32>
    %368 = vector.shape_cast %367 : vector<1xf32> to vector<1x1xf32>
    %369 = vector.extract %368[0, 0] : f32 from vector<1x1xf32>
    %cst_71 = arith.constant 2.400000e+01 : f32
    %370 = arith.divf %369, %cst_71 : f32
    %371 = vector.extract_strided_slice %360 {offsets = [0, 0], sizes = [8, 1], strides = [1, 1]} : vector<24x1xf32> to vector<8x1xf32>
    %cst_72 = arith.constant dense<0.000000e+00> : vector<1xf32>
    %372 = vector.multi_reduction <add>, %371, %cst_72 [0] : vector<8x1xf32> to vector<1xf32>
    %373 = vector.shape_cast %372 : vector<1xf32> to vector<1x1xf32>
    %374 = vector.extract %373[0, 0] : f32 from vector<1x1xf32>
    %375 = vector.extract_strided_slice %360 {offsets = [16, 0], sizes = [8, 1], strides = [1, 1]} : vector<24x1xf32> to vector<8x1xf32>
    %cst_73 = arith.constant dense<0.000000e+00> : vector<1xf32>
    %376 = vector.multi_reduction <add>, %375, %cst_73 [0] : vector<8x1xf32> to vector<1xf32>
    %377 = vector.shape_cast %376 : vector<1xf32> to vector<1x1xf32>
    %378 = vector.extract %377[0, 0] : f32 from vector<1x1xf32>
    %379 = arith.addf %374, %378 : f32
    %cst_74 = arith.constant 4.800000e+01 : f32
    %380 = arith.divf %379, %cst_74 : f32
    %381 = arith.addf %365, %370 : f32
    %cst_75 = arith.constant 5.000000e-01 : f32
    %382 = arith.mulf %cst_75, %381 : f32
    %cst_76 = arith.constant 1.000000e-03 : f32
    %383 = arith.mulf %cst_76, %380 : f32
    %384 = arith.addf %382, %383 : f32
    %c0_77 = arith.constant 0 : index
    %c0_78 = arith.constant 0 : index
    %385 = memref.load %arg2[%c0_77, %c0_78] : memref<1x4xf32, #tpu.memory_space<smem>>
    memref.store %384, %arg2[%c0_77, %c0_78] : memref<1x4xf32, #tpu.memory_space<smem>>
    %c0_79 = arith.constant 0 : index
    %c1 = arith.constant 1 : index
    %386 = memref.load %arg2[%c0_79, %c1] : memref<1x4xf32, #tpu.memory_space<smem>>
    memref.store %365, %arg2[%c0_79, %c1] : memref<1x4xf32, #tpu.memory_space<smem>>
    %c0_80 = arith.constant 0 : index
    %c2 = arith.constant 2 : index
    %387 = memref.load %arg2[%c0_80, %c2] : memref<1x4xf32, #tpu.memory_space<smem>>
    memref.store %370, %arg2[%c0_80, %c2] : memref<1x4xf32, #tpu.memory_space<smem>>
    %c0_81 = arith.constant 0 : index
    %c3 = arith.constant 3 : index
    %388 = memref.load %arg2[%c0_81, %c3] : memref<1x4xf32, #tpu.memory_space<smem>>
    memref.store %380, %arg2[%c0_81, %c3] : memref<1x4xf32, #tpu.memory_space<smem>>
    return
  }
}

</mosaic_0001>

<llo_original>
// kernel: _lambda_.1
$region0: #{_lambda_.1}
  #allocation0 [shape = 'u32[]', space=smem, size = 0x4, offset = 0x4, fixed_abs, tag = 'smem constant byte address 0x4 - core index']
  #allocation1 [shape = 'u32[72,128]{1,0:T(1,128)}', space=vmem, size = 0x9000, scoped, tag = 'internal scratch']
  %s0 = inlined_call_operand.vmem [shape: f32[24,8], index: 0, kind: input, shape index: {}]
  %s1 = inlined_call_operand.vmem [shape: f32[88,40], index: 1, kind: input, shape index: {}]
  %s2 = inlined_call_operand.vmem [shape: f32[1,4], index: 2, kind: output, shape index: {}]
  %s3 = sld [smem:[#allocation0]]
  $region18: #{_lambda_.1} parent=0
    _
  %s5 = ssub.s32 1, %s3
  %s6 = scalar_select 0, %s5, %s3
  $region1: #{_lambda_.1} parent=0
    #allocation2 [shape = 'u8[512]{0}', space=smem, size = 0x200, scoped, tag = 'output window, operand 0, single buffered']
    #allocation3 [shape = 's32[1]{0}', space=sflag, size = 0x4, scoped, tag = 'scoped memory for _lambda_.1']
    %7 = vsyncpa [#allocation3], 0
    // Predicated region
    $region2: #{_lambda_.1} parent=1 // pred_check
      _
    $region3: #{_lambda_.1} parent=1 // pred_check_branch
      %9 = sbr.rel (0) target = $region5
    $region4: #{_lambda_.1} parent=1 // pred_region
      _
    $region5: #{_lambda_.1} parent=1 // pred_fallthru
      _
    // Predicated region
    $region6: #{_lambda_.1} parent=1 // pred_check
      _
    $region7: #{_lambda_.1} parent=1 // pred_check_branch
      %11 = sbr.rel (0) target = $region9
    $region8: #{_lambda_.1} parent=1 // pred_region
      _
    $region9: #{_lambda_.1} parent=1 // pred_fallthru
      _
    %v12 = vld [vmem:[%s0] sm:$0xff]
    %v13 = vld [vmem:[%s0 + $0x8] sm:$0xff]
    %v14 = vld [vmem:[%s0 + $0x10] sm:$0xff]
    %v15 = vand.u32 2147483647, %v12
    %vm16 = vcmp.le.f32.partialorder %v15, 0.7853982
    %vm17 = vcmp.lt.s32.totalorder %v12, 0
    %v18 = vand.u32 %v12, 2139095040
    %v19 = vshrl.u32 %v18, 23
    %v20 = vsub.s32 %v19, 127
    %v21 = vand.u32 2147483647, %v12
    %v22 = vand.u32 %v21, 8388607
    %v23 = vor.u32 %v22, 8388608
    %v24 = vsub.s32 0, %v23
    %v25 = vadd.s32 %v20, 1
    %vm26 = vcmp.gt.s32.totalorder %v25, 0
    %v27 = vsel %vm26, %v25, 0
    %v28 = vshrl.u32 %v27, 5
    %v29 = vand.u32 %v27, 31
    %v30 = vsub.s32 32, %v29
    %v31 = vshrl.u32 683565275, %v30
    %v32 = vshll.u32 683565275, %v29
    %v33 = vshrl.u32 2475754826, %v30
    %v34 = vor.u32 %v32, %v33
    %v35 = vshll.u32 2475754826, %v29
    %v36 = vshrl.u32 2131351028, %v30
    %v37 = vor.u32 %v35, %v36
    %v38 = vshll.u32 2131351028, %v29
    %v39 = vshrl.u32 2102212464, %v30
    %v40 = vor.u32 %v38, %v39
    %v41 = vshll.u32 2102212464, %v29
    %v42 = vshrl.u32 920167782, %v30
    %v43 = vor.u32 %v41, %v42
    %v44 = vshll.u32 920167782, %v29
    %v45 = vshrl.u32 1326507024, %v30
    %v46 = vor.u32 %v44, %v45
    %vm47 = vcmp.lt.s32.totalorder %v28, 1
    %vm48 = vcmp.lt.s32.totalorder %v28, 2
    %vm49 = vcmp.lt.s32.totalorder %v28, 3
    %vm50 = vcmp.lt.s32.totalorder %v28, 4
    %v51 = vsel %vm47, %v31, %v34
    %v52 = vsel %vm50, %v40, 2102212464
    %v53 = vsel %vm49, %v37, %v52
    %v54 = vsel %vm48, %v51, %v53
    %v55 = vsel %vm47, %v34, %v37
    %v56 = vsel %vm50, %v43, 920167782
    %v57 = vsel %vm49, %v40, %v56
    %v58 = vsel %vm48, %v55, %v57
    %v59 = vsel %vm47, %v37, %v40
    %v60 = vsel %vm50, %v46, 1326507024
    %v61 = vsel %vm49, %v43, %v60
    %v62 = vsel %vm48, %v59, %v61
    %v63 = vshll.u32 %v23, 8
    %v64 = vand.u32 %v63, 65535
    %v65 = vshrl.u32 %v63, 16
    %v66 = vand.u32 %v62, 65535
    %v67 = vshrl.u32 %v62, 16
    %v68 = vmul.u32 %v64, %v66
    %v69 = vmul.u32 %v64, %v67
    %v70 = vmul.u32 %v65, %v66
    %v71 = vmul.u32 %v65, %v67
    %v72 = vshll.u32 %v69, 16
    %v73 = vshrl.u32 %v69, 16
    %v74 = vshll.u32 %v70, 16
    %v75 = vshrl.u32 %v70, 16
    %vm76 = vc.u32 %v68, %v72
    %v77 = vsel %vm76, 1, 0
    %v78 = vadd.s32 %v68, %v72
    %v79 = vadd.s32 %v71, %v77
    %vm80 = vc.u32 %v78, %v74
    %v81 = vsel %vm80, 1, 0
    %v82 = vadd.s32 %v78, %v74
    %v83 = vadd.s32 %v79, %v81
    %v84 = vadd.s32 %v83, %v73
    %v85 = vadd.s32 %v84, %v75
    %v86 = vand.u32 %v63, 65535
    %v87 = vshrl.u32 %v63, 16
    %v88 = vand.u32 %v58, 65535
    %v89 = vshrl.u32 %v58, 16
    %v90 = vmul.u32 %v86, %v88
    %v91 = vmul.u32 %v86, %v89
    %v92 = vmul.u32 %v87, %v88
    %v93 = vmul.u32 %v87, %v89
    %v94 = vshll.u32 %v91, 16
    %v95 = vshrl.u32 %v91, 16
    %v96 = vshll.u32 %v92, 16
    %v97 = vshrl.u32 %v92, 16
    %vm98 = vc.u32 %v90, %v94
    %v99 = vsel %vm98, 1, 0
    %v100 = vadd.s32 %v90, %v94
    %v101 = vadd.s32 %v93, %v99
    %vm102 = vc.u32 %v100, %v96
    %v103 = vsel %vm102, 1, 0
    %v104 = vadd.s32 %v100, %v96
    %v105 = vadd.s32 %v101, %v103
    %v106 = vadd.s32 %v105, %v95
    %v107 = vadd.s32 %v106, %v97
    %v108 = vmul.u32 %v63, %v54
    %v109 = vadd.s32 %v85, %v104
    %vm110 = vc.u32 %v85, %v104
    %v111 = vadd.s32 %v107, 1
    %v112 = vsel %vm110, %v111, %v107
    %v113 = vadd.s32 %v108, %v112
    %v114 = vadd.s32 %v113, 536870912
    %v115 = vshrl.u32 %v114, 30
    %v116 = vshll.u32 %v115, 30
    %v117 = vsub.s32 %v113, %v116
    %vm118 = vcmp.lt.s32.totalorder %v117, 0
    %v119 = vsub.s32 0, %v117
    %v120 = vsel %vm118, %v119, %v117
    %v121 = vclz %v120
    %v122 = vsub.s32 %v121, 2
    %vm123 = vcmp.gt.s32.totalorder 0, %v122
    %v124 = vsel %vm123, 0, %v122
    %v125 = vsub.s32 32, %v124
    %v126 = vshll.u32 %v117, %v124
    %v127 = vshrl.u32 %v109, %v125
    %v128 = vor.u32 %v126, %v127
    %v129 = vsub.s32 4294967266, %v124
    %v130 = vadd.s32 %v129, 127
    %v131 = vshll.u32 %v130, 23
    %v132 = vor.u32 4788187, %v131
    %v133 = vand.u32 2147483647, %v132
    %v135 = vcvt.s32.f32 %v128
    %v136 = vmul.f32 %v135, %v133
    %v137 = vxor.u32 %v136, 2147483648
    %v138 = vsel %vm17, %v137, %v136
    %v139 = vsub.s32 4, %v115
    %v140 = vsel %vm17, %v139, %v115
    %v141 = vsel %vm16, %v12, %v138
    %v142 = vsel %vm16, 0, %v140
    %v143 = vmul.f32 %v141, %v141
    %v144 = vmul.f32 %v143, -0.001358992
    %v145 = vadd.f32 %v144, 0.041655596
    %v146 = vmul.f32 %v143, %v145
    %v147 = vadd.f32 %v146, -0.4999988
    %v148 = vmul.f32 %v143, %v147
    %v149 = vadd.f32 1.0, %v148
    %v150 = vmul.f32 %v141, %v141
    %v151 = vmul.f32 %v150, -0.00019511016
    %v152 = vadd.f32 %v151, 0.008332121
    %v153 = vmul.f32 %v150, %v152
    %v154 = vadd.f32 %v153, -0.16666654
    %v155 = vmul.f32 %v150, %v154
    %v156 = vadd.f32 %v155, 1.0
    %v157 = vmul.f32 %v156, %v141
    %vm158 = vweird.f32 %v12
    %v159 = vadd.s32 %v142, 3
    %v160 = vand.u32 %v159, 3
    %vm161 = vcmp.lt.s32.totalorder %v160, 2
    %vm162 = vcmp.eq.s32.totalorder %v160, 0
    %v163 = vxor.u32 %v157, 2147483648
    %v164 = vsel %vm162, %v149, %v163
    %vm165 = vcmp.eq.s32.totalorder %v160, 2
    %v166 = vxor.u32 %v149, 2147483648
    %v167 = vsel %vm165, %v166, %v157
    %v168 = vsel %vm161, %v164, %v167
    %v169 = vsel %vm158, nan, %v168
    %v170 = vand.u32 2147483647, %v13
    %vm171 = vcmp.le.f32.partialorder %v170, 0.7853982
    %vm172 = vcmp.lt.s32.totalorder %v13, 0
    %v173 = vand.u32 %v13, 2139095040
    %v174 = vshrl.u32 %v173, 23
    %v175 = vsub.s32 %v174, 127
    %v176 = vand.u32 2147483647, %v13
    %v177 = vand.u32 %v176, 8388607
    %v178 = vor.u32 %v177, 8388608
    %v179 = vsub.s32 0, %v178
    %v180 = vadd.s32 %v175, 1
    %vm181 = vcmp.gt.s32.totalorder %v180, 0
    %v182 = vsel %vm181, %v180, 0
    %v183 = vshrl.u32 %v182, 5
    %v184 = vand.u32 %v182, 31
    %v185 = vsub.s32 32, %v184
    %v186 = vshrl.u32 683565275, %v185
    %v187 = vshll.u32 683565275, %v184
    %v188 = vshrl.u32 2475754826, %v185
    %v189 = vor.u32 %v187, %v188
    %v190 = vshll.u32 2475754826, %v184
    %v191 = vshrl.u32 2131351028, %v185
    %v192 = vor.u32 %v190, %v191
    %v193 = vshll.u32 2131351028, %v184
    %v194 = vshrl.u32 2102212464, %v185
    %v195 = vor.u32 %v193, %v194
    %v196 = vshll.u32 2102212464, %v184
    %v197 = vshrl.u32 920167782, %v185
    %v198 = vor.u32 %v196, %v197
    %v199 = vshll.u32 920167782, %v184
    %v200 = vshrl.u32 1326507024, %v185
    %v201 = vor.u32 %v199, %v200
    %vm202 = vcmp.lt.s32.totalorder %v183, 1
    %vm203 = vcmp.lt.s32.totalorder %v183, 2
    %vm204 = vcmp.lt.s32.totalorder %v183, 3
    %vm205 = vcmp.lt.s32.totalorder %v183, 4
    %v206 = vsel %vm202, %v186, %v189
    %v207 = vsel %vm205, %v195, 2102212464
    %v208 = vsel %vm204, %v192, %v207
    %v209 = vsel %vm203, %v206, %v208
    %v210 = vsel %vm202, %v189, %v192
    %v211 = vsel %vm205, %v198, 920167782
    %v212 = vsel %vm204, %v195, %v211
    %v213 = vsel %vm203, %v210, %v212
    %v214 = vsel %vm202, %v192, %v195
    %v215 = vsel %vm205, %v201, 1326507024
    %v216 = vsel %vm204, %v198, %v215
    %v217 = vsel %vm203, %v214, %v216
    %v218 = vshll.u32 %v178, 8
    %v219 = vand.u32 %v218, 65535
    %v220 = vshrl.u32 %v218, 16
    %v221 = vand.u32 %v217, 65535
    %v222 = vshrl.u32 %v217, 16
    %v223 = vmul.u32 %v219, %v221
    %v224 = vmul.u32 %v219, %v222
    %v225 = vmul.u32 %v220, %v221
    %v226 = vmul.u32 %v220, %v222
    %v227 = vshll.u32 %v224, 16
    %v228 = vshrl.u32 %v224, 16
    %v229 = vshll.u32 %v225, 16
    %v230 = vshrl.u32 %v225, 16
    %vm231 = vc.u32 %v223, %v227
    %v232 = vsel %vm231, 1, 0
    %v233 = vadd.s32 %v223, %v227
    %v234 = vadd.s32 %v226, %v232
    %vm235 = vc.u32 %v233, %v229
    %v236 = vsel %vm235, 1, 0
    %v237 = vadd.s32 %v233, %v229
    %v238 = vadd.s32 %v234, %v236
    %v239 = vadd.s32 %v238, %v228
    %v240 = vadd.s32 %v239, %v230
    %v241 = vand.u32 %v218, 65535
    %v242 = vshrl.u32 %v218, 16
    %v243 = vand.u32 %v213, 65535
    %v244 = vshrl.u32 %v213, 16
    %v245 = vmul.u32 %v241, %v243
    %v246 = vmul.u32 %v241, %v244
    %v247 = vmul.u32 %v242, %v243
    %v248 = vmul.u32 %v242, %v244
    %v249 = vshll.u32 %v246, 16
    %v250 = vshrl.u32 %v246, 16
    %v251 = vshll.u32 %v247, 16
    %v252 = vshrl.u32 %v247, 16
    %vm253 = vc.u32 %v245, %v249
    %v254 = vsel %vm253, 1, 0
    %v255 = vadd.s32 %v245, %v249
    %v256 = vadd.s32 %v248, %v254
    %vm257 = vc.u32 %v255, %v251
    %v258 = vsel %vm257, 1, 0
    %v259 = vadd.s32 %v255, %v251
    %v260 = vadd.s32 %v256, %v258
    %v261 = vadd.s32 %v260, %v250
    %v262 = vadd.s32 %v261, %v252
    %v263 = vmul.u32 %v218, %v209
    %v264 = vadd.s32 %v240, %v259
    %vm265 = vc.u32 %v240, %v259
    %v266 = vadd.s32 %v262, 1
    %v267 = vsel %vm265, %v266, %v262
    %v268 = vadd.s32 %v263, %v267
    %v269 = vadd.s32 %v268, 536870912
    %v270 = vshrl.u32 %v269, 30
    %v271 = vshll.u32 %v270, 30
    %v272 = vsub.s32 %v268, %v271
    %vm273 = vcmp.lt.s32.totalorder %v272, 0
    %v274 = vsub.s32 0, %v272
    %v275 = vsel %vm273, %v274, %v272
    %v276 = vclz %v275
    %v277 = vsub.s32 %v276, 2
    %vm278 = vcmp.gt.s32.totalorder 0, %v277
    %v279 = vsel %vm278, 0, %v277
    %v280 = vsub.s32 32, %v279
    %v281 = vshll.u32 %v272, %v279
    %v282 = vshrl.u32 %v264, %v280
    %v283 = vor.u32 %v281, %v282
    %v284 = vsub.s32 4294967266, %v279
    %v285 = vadd.s32 %v284, 127
    %v286 = vshll.u32 %v285, 23
    %v287 = vor.u32 4788187, %v286
    %v288 = vand.u32 2147483647, %v287
    %v290 = vcvt.s32.f32 %v283
    %v291 = vmul.f32 %v290, %v288
    %v292 = vxor.u32 %v291, 2147483648
    %v293 = vsel %vm172, %v292, %v291
    %v294 = vsub.s32 4, %v270
    %v295 = vsel %vm172, %v294, %v270
    %v296 = vsel %vm171, %v13, %v293
    %v297 = vsel %vm171, 0, %v295
    %v298 = vmul.f32 %v296, %v296
    %v299 = vmul.f32 %v298, -0.001358992
    %v300 = vadd.f32 %v299, 0.041655596
    %v301 = vmul.f32 %v298, %v300
    %v302 = vadd.f32 %v301, -0.4999988
    %v303 = vmul.f32 %v298, %v302
    %v304 = vadd.f32 1.0, %v303
    %v305 = vmul.f32 %v296, %v296
    %v306 = vmul.f32 %v305, -0.00019511016
    %v307 = vadd.f32 %v306, 0.008332121
    %v308 = vmul.f32 %v305, %v307
    %v309 = vadd.f32 %v308, -0.16666654
    %v310 = vmul.f32 %v305, %v309
    %v311 = vadd.f32 %v310, 1.0
    %v312 = vmul.f32 %v311, %v296
    %vm313 = vweird.f32 %v13
    %v314 = vadd.s32 %v297, 3
    %v315 = vand.u32 %v314, 3
    %vm316 = vcmp.lt.s32.totalorder %v315, 2
    %vm317 = vcmp.eq.s32.totalorder %v315, 0
    %v318 = vxor.u32 %v312, 2147483648
    %v319 = vsel %vm317, %v304, %v318
    %vm320 = vcmp.eq.s32.totalorder %v315, 2
    %v321 = vxor.u32 %v304, 2147483648
    %v322 = vsel %vm320, %v321, %v312
    %v323 = vsel %vm316, %v319, %v322
    %v324 = vsel %vm313, nan, %v323
    %v325 = vand.u32 2147483647, %v14
    %vm326 = vcmp.le.f32.partialorder %v325, 0.7853982
    %vm327 = vcmp.lt.s32.totalorder %v14, 0
    %v328 = vand.u32 %v14, 2139095040
    %v329 = vshrl.u32 %v328, 23
    %v330 = vsub.s32 %v329, 127
    %v331 = vand.u32 2147483647, %v14
    %v332 = vand.u32 %v331, 8388607
    %v333 = vor.u32 %v332, 8388608
    %v334 = vsub.s32 0, %v333
    %v335 = vadd.s32 %v330, 1
    %vm336 = vcmp.gt.s32.totalorder %v335, 0
    %v337 = vsel %vm336, %v335, 0
    %v338 = vshrl.u32 %v337, 5
    %v339 = vand.u32 %v337, 31
    %v340 = vsub.s32 32, %v339
    %v341 = vshrl.u32 683565275, %v340
    %v342 = vshll.u32 683565275, %v339
    %v343 = vshrl.u32 2475754826, %v340
    %v344 = vor.u32 %v342, %v343
    %v345 = vshll.u32 2475754826, %v339
    %v346 = vshrl.u32 2131351028, %v340
    %v347 = vor.u32 %v345, %v346
    %v348 = vshll.u32 2131351028, %v339
    %v349 = vshrl.u32 2102212464, %v340
    %v350 = vor.u32 %v348, %v349
    %v351 = vshll.u32 2102212464, %v339
    %v352 = vshrl.u32 920167782, %v340
    %v353 = vor.u32 %v351, %v352
    %v354 = vshll.u32 920167782, %v339
    %v355 = vshrl.u32 1326507024, %v340
    %v356 = vor.u32 %v354, %v355
    %vm357 = vcmp.lt.s32.totalorder %v338, 1
    %vm358 = vcmp.lt.s32.totalorder %v338, 2
    %vm359 = vcmp.lt.s32.totalorder %v338, 3
    %vm360 = vcmp.lt.s32.totalorder %v338, 4
    %v361 = vsel %vm357, %v341, %v344
    %v362 = vsel %vm360, %v350, 2102212464
    %v363 = vsel %vm359, %v347, %v362
    %v364 = vsel %vm358, %v361, %v363
    %v365 = vsel %vm357, %v344, %v347
    %v366 = vsel %vm360, %v353, 920167782
    %v367 = vsel %vm359, %v350, %v366
    %v368 = vsel %vm358, %v365, %v367
    %v369 = vsel %vm357, %v347, %v350
    %v370 = vsel %vm360, %v356, 1326507024
    %v371 = vsel %vm359, %v353, %v370
    %v372 = vsel %vm358, %v369, %v371
    %v373 = vshll.u32 %v333, 8
    %v374 = vand.u32 %v373, 65535
    %v375 = vshrl.u32 %v373, 16
    %v376 = vand.u32 %v372, 65535
    %v377 = vshrl.u32 %v372, 16
    %v378 = vmul.u32 %v374, %v376
    %v379 = vmul.u32 %v374, %v377
    %v380 = vmul.u32 %v375, %v376
    %v381 = vmul.u32 %v375, %v377
    %v382 = vshll.u32 %v379, 16
    %v383 = vshrl.u32 %v379, 16
    %v384 = vshll.u32 %v380, 16
    %v385 = vshrl.u32 %v380, 16
    %vm386 = vc.u32 %v378, %v382
    %v387 = vsel %vm386, 1, 0
    %v388 = vadd.s32 %v378, %v382
    %v389 = vadd.s32 %v381, %v387
    %vm390 = vc.u32 %v388, %v384
    %v391 = vsel %vm390, 1, 0
    %v392 = vadd.s32 %v388, %v384
    %v393 = vadd.s32 %v389, %v391
    %v394 = vadd.s32 %v393, %v383
    %v395 = vadd.s32 %v394, %v385
    %v396 = vand.u32 %v373, 65535
    %v397 = vshrl.u32 %v373, 16
    %v398 = vand.u32 %v368, 65535
    %v399 = vshrl.u32 %v368, 16
    %v400 = vmul.u32 %v396, %v398
    %v401 = vmul.u32 %v396, %v399
    %v402 = vmul.u32 %v397, %v398
    %v403 = vmul.u32 %v397, %v399
    %v404 = vshll.u32 %v401, 16
    %v405 = vshrl.u32 %v401, 16
    %v406 = vshll.u32 %v402, 16
    %v407 = vshrl.u32 %v402, 16
    %vm408 = vc.u32 %v400, %v404
    %v409 = vsel %vm408, 1, 0
    %v410 = vadd.s32 %v400, %v404
    %v411 = vadd.s32 %v403, %v409
    %vm412 = vc.u32 %v410, %v406
    %v413 = vsel %vm412, 1, 0
    %v414 = vadd.s32 %v410, %v406
    %v415 = vadd.s32 %v411, %v413
    %v416 = vadd.s32 %v415, %v405
    %v417 = vadd.s32 %v416, %v407
    %v418 = vmul.u32 %v373, %v364
    %v419 = vadd.s32 %v395, %v414
    %vm420 = vc.u32 %v395, %v414
    %v421 = vadd.s32 %v417, 1
    %v422 = vsel %vm420, %v421, %v417
    %v423 = vadd.s32 %v418, %v422
    %v424 = vadd.s32 %v423, 536870912
    %v425 = vshrl.u32 %v424, 30
    %v426 = vshll.u32 %v425, 30
    %v427 = vsub.s32 %v423, %v426
    %vm428 = vcmp.lt.s32.totalorder %v427, 0
    %v429 = vsub.s32 0, %v427
    %v430 = vsel %vm428, %v429, %v427
    %v431 = vclz %v430
    %v432 = vsub.s32 %v431, 2
    %vm433 = vcmp.gt.s32.totalorder 0, %v432
    %v434 = vsel %vm433, 0, %v432
    %v435 = vsub.s32 32, %v434
    %v436 = vshll.u32 %v427, %v434
    %v437 = vshrl.u32 %v419, %v435
    %v438 = vor.u32 %v436, %v437
    %v439 = vsub.s32 4294967266, %v434
    %v440 = vadd.s32 %v439, 127
    %v441 = vshll.u32 %v440, 23
    %v442 = vor.u32 4788187, %v441
    %v443 = vand.u32 2147483647, %v442
    %v445 = vcvt.s32.f32 %v438
    %v446 = vmul.f32 %v445, %v443
    %v447 = vxor.u32 %v446, 2147483648
    %v448 = vsel %vm327, %v447, %v446
    %v449 = vsub.s32 4, %v425
    %v450 = vsel %vm327, %v449, %v425
    %v451 = vsel %vm326, %v14, %v448
    %v452 = vsel %vm326, 0, %v450
    %v453 = vmul.f32 %v451, %v451
    %v454 = vmul.f32 %v453, -0.001358992
    %v455 = vadd.f32 %v454, 0.041655596
    %v456 = vmul.f32 %v453, %v455
    %v457 = vadd.f32 %v456, -0.4999988
    %v458 = vmul.f32 %v453, %v457
    %v459 = vadd.f32 1.0, %v458
    %v460 = vmul.f32 %v451, %v451
    %v461 = vmul.f32 %v460, -0.00019511016
    %v462 = vadd.f32 %v461, 0.008332121
    %v463 = vmul.f32 %v460, %v462
    %v464 = vadd.f32 %v463, -0.16666654
    %v465 = vmul.f32 %v460, %v464
    %v466 = vadd.f32 %v465, 1.0
    %v467 = vmul.f32 %v466, %v451
    %vm468 = vweird.f32 %v14
    %v469 = vadd.s32 %v452, 3
    %v470 = vand.u32 %v469, 3
    %vm471 = vcmp.lt.s32.totalorder %v470, 2
    %vm472 = vcmp.eq.s32.totalorder %v470, 0
    %v473 = vxor.u32 %v467, 2147483648
    %v474 = vsel %vm472, %v459, %v473
    %vm475 = vcmp.eq.s32.totalorder %v470, 2
    %v476 = vxor.u32 %v459, 2147483648
    %v477 = vsel %vm475, %v476, %v467
    %v478 = vsel %vm471, %v474, %v477
    %v479 = vsel %vm468, nan, %v478
    %v480 = vand.u32 2147483647, %v12
    %vm481 = vcmp.le.f32.partialorder %v480, 0.7853982
    %vm482 = vcmp.lt.s32.totalorder %v12, 0
    %v483 = vand.u32 %v12, 2139095040
    %v484 = vshrl.u32 %v483, 23
    %v485 = vsub.s32 %v484, 127
    %v486 = vand.u32 2147483647, %v12
    %v487 = vand.u32 %v486, 8388607
    %v488 = vor.u32 %v487, 8388608
    %v489 = vsub.s32 0, %v488
    %v490 = vadd.s32 %v485, 1
    %vm491 = vcmp.gt.s32.totalorder %v490, 0
    %v492 = vsel %vm491, %v490, 0
    %v493 = vshrl.u32 %v492, 5
    %v494 = vand.u32 %v492, 31
    %v495 = vsub.s32 32, %v494
    %v496 = vshrl.u32 683565275, %v495
    %v497 = vshll.u32 683565275, %v494
    %v498 = vshrl.u32 2475754826, %v495
    %v499 = vor.u32 %v497, %v498
    %v500 = vshll.u32 2475754826, %v494
    %v501 = vshrl.u32 2131351028, %v495
    %v502 = vor.u32 %v500, %v501
    %v503 = vshll.u32 2131351028, %v494
    %v504 = vshrl.u32 2102212464, %v495
    %v505 = vor.u32 %v503, %v504
    %v506 = vshll.u32 2102212464, %v494
    %v507 = vshrl.u32 920167782, %v495
    %v508 = vor.u32 %v506, %v507
    %v509 = vshll.u32 920167782, %v494
    %v510 = vshrl.u32 1326507024, %v495
    %v511 = vor.u32 %v509, %v510
    %vm512 = vcmp.lt.s32.totalorder %v493, 1
    %vm513 = vcmp.lt.s32.totalorder %v493, 2
    %vm514 = vcmp.lt.s32.totalorder %v493, 3
    %vm515 = vcmp.lt.s32.totalorder %v493, 4
    %v516 = vsel %vm512, %v496, %v499
    %v517 = vsel %vm515, %v505, 2102212464
    %v518 = vsel %vm514, %v502, %v517
    %v519 = vsel %vm513, %v516, %v518
    %v520 = vsel %vm512, %v499, %v502
    %v521 = vsel %vm515, %v508, 920167782
    %v522 = vsel %vm514, %v505, %v521
    %v523 = vsel %vm513, %v520, %v522
    %v524 = vsel %vm512, %v502, %v505
    %v525 = vsel %vm515, %v511, 1326507024
    %v526 = vsel %vm514, %v508, %v525
    %v527 = vsel %vm513, %v524, %v526
    %v528 = vshll.u32 %v488, 8
    %v529 = vand.u32 %v528, 65535
    %v530 = vshrl.u32 %v528, 16
    %v531 = vand.u32 %v527, 65535
    %v532 = vshrl.u32 %v527, 16
    %v533 = vmul.u32 %v529, %v531
    %v534 = vmul.u32 %v529, %v532
    %v535 = vmul.u32 %v530, %v531
    %v536 = vmul.u32 %v530, %v532
    %v537 = vshll.u32 %v534, 16
    %v538 = vshrl.u32 %v534, 16
    %v539 = vshll.u32 %v535, 16
    %v540 = vshrl.u32 %v535, 16
    %vm541 = vc.u32 %v533, %v537
    %v542 = vsel %vm541, 1, 0
    %v543 = vadd.s32 %v533, %v537
    %v544 = vadd.s32 %v536, %v542
    %vm545 = vc.u32 %v543, %v539
    %v546 = vsel %vm545, 1, 0
    %v547 = vadd.s32 %v543, %v539
    %v548 = vadd.s32 %v544, %v546
    %v549 = vadd.s32 %v548, %v538
    %v550 = vadd.s32 %v549, %v540
    %v551 = vand.u32 %v528, 65535
    %v552 = vshrl.u32 %v528, 16
    %v553 = vand.u32 %v523, 65535
    %v554 = vshrl.u32 %v523, 16
    %v555 = vmul.u32 %v551, %v553
    %v556 = vmul.u32 %v551, %v554
    %v557 = vmul.u32 %v552, %v553
    %v558 = vmul.u32 %v552, %v554
    %v559 = vshll.u32 %v556, 16
    %v560 = vshrl.u32 %v556, 16
    %v561 = vshll.u32 %v557, 16
    %v562 = vshrl.u32 %v557, 16
    %vm563 = vc.u32 %v555, %v559
    %v564 = vsel %vm563, 1, 0
    %v565 = vadd.s32 %v555, %v559
    %v566 = vadd.s32 %v558, %v564
    %vm567 = vc.u32 %v565, %v561
    %v568 = vsel %vm567, 1, 0
    %v569 = vadd.s32 %v565, %v561
    %v570 = vadd.s32 %v566, %v568
    %v571 = vadd.s32 %v570, %v560
    %v572 = vadd.s32 %v571, %v562
    %v573 = vmul.u32 %v528, %v519
    %v574 = vadd.s32 %v550, %v569
    %vm575 = vc.u32 %v550, %v569
    %v576 = vadd.s32 %v572, 1
    %v577 = vsel %vm575, %v576, %v572
    %v578 = vadd.s32 %v573, %v577
    %v579 = vadd.s32 %v578, 536870912
    %v580 = vshrl.u32 %v579, 30
    %v581 = vshll.u32 %v580, 30
    %v582 = vsub.s32 %v578, %v581
    %vm583 = vcmp.lt.s32.totalorder %v582, 0
    %v584 = vsub.s32 0, %v582
    %v585 = vsel %vm583, %v584, %v582
    %v586 = vclz %v585
    %v587 = vsub.s32 %v586, 2
    %vm588 = vcmp.gt.s32.totalorder 0, %v587
    %v589 = vsel %vm588, 0, %v587
    %v590 = vsub.s32 32, %v589
    %v591 = vshll.u32 %v582, %v589
    %v592 = vshrl.u32 %v574, %v590
    %v593 = vor.u32 %v591, %v592
    %v594 = vsub.s32 4294967266, %v589
    %v595 = vadd.s32 %v594, 127
    %v596 = vshll.u32 %v595, 23
    %v597 = vor.u32 4788187, %v596
    %v598 = vand.u32 2147483647, %v597
    %v600 = vcvt.s32.f32 %v593
    %v601 = vmul.f32 %v600, %v598
    %v602 = vxor.u32 %v601, 2147483648
    %v603 = vsel %vm482, %v602, %v601
    %v604 = vsub.s32 4, %v580
    %v605 = vsel %vm482, %v604, %v580
    %v606 = vsel %vm481, %v12, %v603
    %v607 = vsel %vm481, 0, %v605
    %v608 = vmul.f32 %v606, %v606
    %v609 = vmul.f32 %v608, -0.001358992
    %v610 = vadd.f32 %v609, 0.041655596
    %v611 = vmul.f32 %v608, %v610
    %v612 = vadd.f32 %v611, -0.4999988
    %v613 = vmul.f32 %v608, %v612
    %v614 = vadd.f32 1.0, %v613
    %v615 = vmul.f32 %v606, %v606
    %v616 = vmul.f32 %v615, -0.00019511016
    %v617 = vadd.f32 %v616, 0.008332121
    %v618 = vmul.f32 %v615, %v617
    %v619 = vadd.f32 %v618, -0.16666654
    %v620 = vmul.f32 %v615, %v619
    %v621 = vadd.f32 %v620, 1.0
    %v622 = vmul.f32 %v621, %v606
    %vm623 = vweird.f32 %v12
    %v624 = vand.u32 %v607, 3
    %vm625 = vcmp.lt.s32.totalorder %v624, 2
    %vm626 = vcmp.eq.s32.totalorder %v624, 0
    %v627 = vxor.u32 %v622, 2147483648
    %v628 = vsel %vm626, %v614, %v627
    %vm629 = vcmp.eq.s32.totalorder %v624, 2
    %v630 = vxor.u32 %v614, 2147483648
    %v631 = vsel %vm629, %v630, %v622
    %v632 = vsel %vm625, %v628, %v631
    %v633 = vsel %vm623, nan, %v632
    %v634 = vand.u32 2147483647, %v13
    %vm635 = vcmp.le.f32.partialorder %v634, 0.7853982
    %vm636 = vcmp.lt.s32.totalorder %v13, 0
    %v637 = vand.u32 %v13, 2139095040
    %v638 = vshrl.u32 %v637, 23
    %v639 = vsub.s32 %v638, 127
    %v640 = vand.u32 2147483647, %v13
    %v641 = vand.u32 %v640, 8388607
    %v642 = vor.u32 %v641, 8388608
    %v643 = vsub.s32 0, %v642
    %v644 = vadd.s32 %v639, 1
    %vm645 = vcmp.gt.s32.totalorder %v644, 0
    %v646 = vsel %vm645, %v644, 0
    %v647 = vshrl.u32 %v646, 5
    %v648 = vand.u32 %v646, 31
    %v649 = vsub.s32 32, %v648
    %v650 = vshrl.u32 683565275, %v649
    %v651 = vshll.u32 683565275, %v648
    %v652 = vshrl.u32 2475754826, %v649
    %v653 = vor.u32 %v651, %v652
    %v654 = vshll.u32 2475754826, %v648
    %v655 = vshrl.u32 2131351028, %v649
    %v656 = vor.u32 %v654, %v655
    %v657 = vshll.u32 2131351028, %v648
    %v658 = vshrl.u32 2102212464, %v649
    %v659 = vor.u32 %v657, %v658
    %v660 = vshll.u32 2102212464, %v648
    %v661 = vshrl.u32 920167782, %v649
    %v662 = vor.u32 %v660, %v661
    %v663 = vshll.u32 920167782, %v648
    %v664 = vshrl.u32 1326507024, %v649
    %v665 = vor.u32 %v663, %v664
    %vm666 = vcmp.lt.s32.totalorder %v647, 1
    %vm667 = vcmp.lt.s32.totalorder %v647, 2
    %vm668 = vcmp.lt.s32.totalorder %v647, 3
    %vm669 = vcmp.lt.s32.totalorder %v647, 4
    %v670 = vsel %vm666, %v650, %v653
    %v671 = vsel %vm669, %v659, 2102212464
    %v672 = vsel %vm668, %v656, %v671
    %v673 = vsel %vm667, %v670, %v672
    %v674 = vsel %vm666, %v653, %v656
    %v675 = vsel %vm669, %v662, 920167782
    %v676 = vsel %vm668, %v659, %v675
    %v677 = vsel %vm667, %v674, %v676
    %v678 = vsel %vm666, %v656, %v659
    %v679 = vsel %vm669, %v665, 1326507024
    %v680 = vsel %vm668, %v662, %v679
    %v681 = vsel %vm667, %v678, %v680
    %v682 = vshll.u32 %v642, 8
    %v683 = vand.u32 %v682, 65535
    %v684 = vshrl.u32 %v682, 16
    %v685 = vand.u32 %v681, 65535
    %v686 = vshrl.u32 %v681, 16
    %v687 = vmul.u32 %v683, %v685
    %v688 = vmul.u32 %v683, %v686
    %v689 = vmul.u32 %v684, %v685
    %v690 = vmul.u32 %v684, %v686
    %v691 = vshll.u32 %v688, 16
    %v692 = vshrl.u32 %v688, 16
    %v693 = vshll.u32 %v689, 16
    %v694 = vshrl.u32 %v689, 16
    %vm695 = vc.u32 %v687, %v691
    %v696 = vsel %vm695, 1, 0
    %v697 = vadd.s32 %v687, %v691
    %v698 = vadd.s32 %v690, %v696
    %vm699 = vc.u32 %v697, %v693
    %v700 = vsel %vm699, 1, 0
    %v701 = vadd.s32 %v697, %v693
    %v702 = vadd.s32 %v698, %v700
    %v703 = vadd.s32 %v702, %v692
    %v704 = vadd.s32 %v703, %v694
    %v705 = vand.u32 %v682, 65535
    %v706 = vshrl.u32 %v682, 16
    %v707 = vand.u32 %v677, 65535
    %v708 = vshrl.u32 %v677, 16
    %v709 = vmul.u32 %v705, %v707
    %v710 = vmul.u32 %v705, %v708
    %v711 = vmul.u32 %v706, %v707
    %v712 = vmul.u32 %v706, %v708
    %v713 = vshll.u32 %v710, 16
    %v714 = vshrl.u32 %v710, 16
    %v715 = vshll.u32 %v711, 16
    %v716 = vshrl.u32 %v711, 16
    %vm717 = vc.u32 %v709, %v713
    %v718 = vsel %vm717, 1, 0
    %v719 = vadd.s32 %v709, %v713
    %v720 = vadd.s32 %v712, %v718
    %vm721 = vc.u32 %v719, %v715
    %v722 = vsel %vm721, 1, 0
    %v723 = vadd.s32 %v719, %v715
    %v724 = vadd.s32 %v720, %v722
    %v725 = vadd.s32 %v724, %v714
    %v726 = vadd.s32 %v725, %v716
    %v727 = vmul.u32 %v682, %v673
    %v728 = vadd.s32 %v704, %v723
    %vm729 = vc.u32 %v704, %v723
    %v730 = vadd.s32 %v726, 1
    %v731 = vsel %vm729, %v730, %v726
    %v732 = vadd.s32 %v727, %v731
    %v733 = vadd.s32 %v732, 536870912
    %v734 = vshrl.u32 %v733, 30
    %v735 = vshll.u32 %v734, 30
    %v736 = vsub.s32 %v732, %v735
    %vm737 = vcmp.lt.s32.totalorder %v736, 0
    %v738 = vsub.s32 0, %v736
    %v739 = vsel %vm737, %v738, %v736
    %v740 = vclz %v739
    %v741 = vsub.s32 %v740, 2
    %vm742 = vcmp.gt.s32.totalorder 0, %v741
    %v743 = vsel %vm742, 0, %v741
    %v744 = vsub.s32 32, %v743
    %v745 = vshll.u32 %v736, %v743
    %v746 = vshrl.u32 %v728, %v744
    %v747 = vor.u32 %v745, %v746
    %v748 = vsub.s32 4294967266, %v743
    %v749 = vadd.s32 %v748, 127
    %v750 = vshll.u32 %v749, 23
    %v751 = vor.u32 4788187, %v750
    %v752 = vand.u32 2147483647, %v751
    %v754 = vcvt.s32.f32 %v747
    %v755 = vmul.f32 %v754, %v752
    %v756 = vxor.u32 %v755, 2147483648
    %v757 = vsel %vm636, %v756, %v755
    %v758 = vsub.s32 4, %v734
    %v759 = vsel %vm636, %v758, %v734
    %v760 = vsel %vm635, %v13, %v757
    %v761 = vsel %vm635, 0, %v759
    %v762 = vmul.f32 %v760, %v760
    %v763 = vmul.f32 %v762, -0.001358992
    %v764 = vadd.f32 %v763, 0.041655596
    %v765 = vmul.f32 %v762, %v764
    %v766 = vadd.f32 %v765, -0.4999988
    %v767 = vmul.f32 %v762, %v766
    %v768 = vadd.f32 1.0, %v767
    %v769 = vmul.f32 %v760, %v760
    %v770 = vmul.f32 %v769, -0.00019511016
    %v771 = vadd.f32 %v770, 0.008332121
    %v772 = vmul.f32 %v769, %v771
    %v773 = vadd.f32 %v772, -0.16666654
    %v774 = vmul.f32 %v769, %v773
    %v775 = vadd.f32 %v774, 1.0
    %v776 = vmul.f32 %v775, %v760
    %vm777 = vweird.f32 %v13
    %v778 = vand.u32 %v761, 3
    %vm779 = vcmp.lt.s32.totalorder %v778, 2
    %vm780 = vcmp.eq.s32.totalorder %v778, 0
    %v781 = vxor.u32 %v776, 2147483648
    %v782 = vsel %vm780, %v768, %v781
    %vm783 = vcmp.eq.s32.totalorder %v778, 2
    %v784 = vxor.u32 %v768, 2147483648
    %v785 = vsel %vm783, %v784, %v776
    %v786 = vsel %vm779, %v782, %v785
    %v787 = vsel %vm777, nan, %v786
    %v788 = vand.u32 2147483647, %v14
    %vm789 = vcmp.le.f32.partialorder %v788, 0.7853982
    %vm790 = vcmp.lt.s32.totalorder %v14, 0
    %v791 = vand.u32 %v14, 2139095040
    %v792 = vshrl.u32 %v791, 23
    %v793 = vsub.s32 %v792, 127
    %v794 = vand.u32 2147483647, %v14
    %v795 = vand.u32 %v794, 8388607
    %v796 = vor.u32 %v795, 8388608
    %v797 = vsub.s32 0, %v796
    %v798 = vadd.s32 %v793, 1
    %vm799 = vcmp.gt.s32.totalorder %v798, 0
    %v800 = vsel %vm799, %v798, 0
    %v801 = vshrl.u32 %v800, 5
    %v802 = vand.u32 %v800, 31
    %v803 = vsub.s32 32, %v802
    %v804 = vshrl.u32 683565275, %v803
    %v805 = vshll.u32 683565275, %v802
    %v806 = vshrl.u32 2475754826, %v803
    %v807 = vor.u32 %v805, %v806
    %v808 = vshll.u32 2475754826, %v802
    %v809 = vshrl.u32 2131351028, %v803
    %v810 = vor.u32 %v808, %v809
    %v811 = vshll.u32 2131351028, %v802
    %v812 = vshrl.u32 2102212464, %v803
    %v813 = vor.u32 %v811, %v812
    %v814 = vshll.u32 2102212464, %v802
    %v815 = vshrl.u32 920167782, %v803
    %v816 = vor.u32 %v814, %v815
    %v817 = vshll.u32 920167782, %v802
    %v818 = vshrl.u32 1326507024, %v803
    %v819 = vor.u32 %v817, %v818
    %vm820 = vcmp.lt.s32.totalorder %v801, 1
    %vm821 = vcmp.lt.s32.totalorder %v801, 2
    %vm822 = vcmp.lt.s32.totalorder %v801, 3
    %vm823 = vcmp.lt.s32.totalorder %v801, 4
    %v824 = vsel %vm820, %v804, %v807
    %v825 = vsel %vm823, %v813, 2102212464
    %v826 = vsel %vm822, %v810, %v825
    %v827 = vsel %vm821, %v824, %v826
    %v828 = vsel %vm820, %v807, %v810
    %v829 = vsel %vm823, %v816, 920167782
    %v830 = vsel %vm822, %v813, %v829
    %v831 = vsel %vm821, %v828, %v830
    %v832 = vsel %vm820, %v810, %v813
    %v833 = vsel %vm823, %v819, 1326507024
    %v834 = vsel %vm822, %v816, %v833
    %v835 = vsel %vm821, %v832, %v834
    %v836 = vshll.u32 %v796, 8
    %v837 = vand.u32 %v836, 65535
    %v838 = vshrl.u32 %v836, 16
    %v839 = vand.u32 %v835, 65535
    %v840 = vshrl.u32 %v835, 16
    %v841 = vmul.u32 %v837, %v839
    %v842 = vmul.u32 %v837, %v840
    %v843 = vmul.u32 %v838, %v839
    %v844 = vmul.u32 %v838, %v840
    %v845 = vshll.u32 %v842, 16
    %v846 = vshrl.u32 %v842, 16
    %v847 = vshll.u32 %v843, 16
    %v848 = vshrl.u32 %v843, 16
    %vm849 = vc.u32 %v841, %v845
    %v850 = vsel %vm849, 1, 0
    %v851 = vadd.s32 %v841, %v845
    %v852 = vadd.s32 %v844, %v850
    %vm853 = vc.u32 %v851, %v847
    %v854 = vsel %vm853, 1, 0
    %v855 = vadd.s32 %v851, %v847
    %v856 = vadd.s32 %v852, %v854
    %v857 = vadd.s32 %v856, %v846
    %v858 = vadd.s32 %v857, %v848
    %v859 = vand.u32 %v836, 65535
    %v860 = vshrl.u32 %v836, 16
    %v861 = vand.u32 %v831, 65535
    %v862 = vshrl.u32 %v831, 16
    %v863 = vmul.u32 %v859, %v861
    %v864 = vmul.u32 %v859, %v862
    %v865 = vmul.u32 %v860, %v861
    %v866 = vmul.u32 %v860, %v862
    %v867 = vshll.u32 %v864, 16
    %v868 = vshrl.u32 %v864, 16
    %v869 = vshll.u32 %v865, 16
    %v870 = vshrl.u32 %v865, 16
    %vm871 = vc.u32 %v863, %v867
    %v872 = vsel %vm871, 1, 0
    %v873 = vadd.s32 %v863, %v867
    %v874 = vadd.s32 %v866, %v872
    %vm875 = vc.u32 %v873, %v869
    %v876 = vsel %vm875, 1, 0
    %v877 = vadd.s32 %v873, %v869
    %v878 = vadd.s32 %v874, %v876
    %v879 = vadd.s32 %v878, %v868
    %v880 = vadd.s32 %v879, %v870
    %v881 = vmul.u32 %v836, %v827
    %v882 = vadd.s32 %v858, %v877
    %vm883 = vc.u32 %v858, %v877
    %v884 = vadd.s32 %v880, 1
    %v885 = vsel %vm883, %v884, %v880
    %v886 = vadd.s32 %v881, %v885
    %v887 = vadd.s32 %v886, 536870912
    %v888 = vshrl.u32 %v887, 30
    %v889 = vshll.u32 %v888, 30
    %v890 = vsub.s32 %v886, %v889
    %vm891 = vcmp.lt.s32.totalorder %v890, 0
    %v892 = vsub.s32 0, %v890
    %v893 = vsel %vm891, %v892, %v890
    %v894 = vclz %v893
    %v895 = vsub.s32 %v894, 2
    %vm896 = vcmp.gt.s32.totalorder 0, %v895
    %v897 = vsel %vm896, 0, %v895
    %v898 = vsub.s32 32, %v897
    %v899 = vshll.u32 %v890, %v897
    %v900 = vshrl.u32 %v882, %v898
    %v901 = vor.u32 %v899, %v900
    %v902 = vsub.s32 4294967266, %v897
    %v903 = vadd.s32 %v902, 127
    %v904 = vshll.u32 %v903, 23
    %v905 = vor.u32 4788187, %v904
    %v906 = vand.u32 2147483647, %v905
    %v908 = vcvt.s32.f32 %v901
    %v909 = vmul.f32 %v908, %v906
    %v910 = vxor.u32 %v909, 2147483648
    %v911 = vsel %vm790, %v910, %v909
    %v912 = vsub.s32 4, %v888
    %v913 = vsel %vm790, %v912, %v888
    %v914 = vsel %vm789, %v14, %v911
    %v915 = vsel %vm789, 0, %v913
    %v916 = vmul.f32 %v914, %v914
    %v917 = vmul.f32 %v916, -0.001358992
    %v918 = vadd.f32 %v917, 0.041655596
    %v919 = vmul.f32 %v916, %v918
    %v920 = vadd.f32 %v919, -0.4999988
    %v921 = vmul.f32 %v916, %v920
    %v922 = vadd.f32 1.0, %v921
    %v923 = vmul.f32 %v914, %v914
    %v924 = vmul.f32 %v923, -0.00019511016
    %v925 = vadd.f32 %v924, 0.008332121
    %v926 = vmul.f32 %v923, %v925
    %v927 = vadd.f32 %v926, -0.16666654
    %v928 = vmul.f32 %v923, %v927
    %v929 = vadd.f32 %v928, 1.0
    %v930 = vmul.f32 %v929, %v914
    %vm931 = vweird.f32 %v14
    %v932 = vand.u32 %v915, 3
    %vm933 = vcmp.lt.s32.totalorder %v932, 2
    %vm934 = vcmp.eq.s32.totalorder %v932, 0
    %v935 = vxor.u32 %v930, 2147483648
    %v936 = vsel %vm934, %v922, %v935
    %vm937 = vcmp.eq.s32.totalorder %v932, 2
    %v938 = vxor.u32 %v922, 2147483648
    %v939 = vsel %vm937, %v938, %v930
    %v940 = vsel %vm933, %v936, %v939
    %v941 = vsel %vm931, nan, %v940
    %v943 = vrot.slane %v633, 1
    %v945 = vmul.f32 %v633, %v943
    %v947 = vrot.slane %v169, 1
    %v949 = vmul.f32 %v633, %v947
    %v950 = vrot.slane %v169, 2
    %v952 = vmul.f32 %v949, %v950
    %v953 = vrot.slane %v633, 2
    %v955 = vmul.f32 %v169, %v953
    %v956 = vsub.f32 %v952, %v955
    %v957 = vmul.f32 %v949, %v953
    %v958 = vmul.f32 %v169, %v950
    %v959 = vadd.f32 %v957, %v958
    %v960 = vmul.f32 %v169, %v943
    %v961 = vmul.f32 %v169, %v947
    %v962 = vmul.f32 %v961, %v950
    %v963 = vmul.f32 %v633, %v953
    %v964 = vadd.f32 %v962, %v963
    %v965 = vmul.f32 %v961, %v953
    %v966 = vmul.f32 %v633, %v950
    %v967 = vsub.f32 %v965, %v966
    %v968 = vsub.f32 0.0, %v169
    %v970 = vrot.slane %v787, 1
    %v972 = vmul.f32 %v787, %v970
    %v974 = vrot.slane %v324, 1
    %v976 = vmul.f32 %v787, %v974
    %v977 = vrot.slane %v324, 2
    %v979 = vmul.f32 %v976, %v977
    %v980 = vrot.slane %v787, 2
    %v982 = vmul.f32 %v324, %v980
    %v983 = vsub.f32 %v979, %v982
    %v984 = vmul.f32 %v976, %v980
    %v985 = vmul.f32 %v324, %v977
    %v986 = vadd.f32 %v984, %v985
    %v987 = vmul.f32 %v324, %v970
    %v988 = vmul.f32 %v324, %v974
    %v989 = vmul.f32 %v988, %v977
    %v990 = vmul.f32 %v787, %v980
    %v991 = vadd.f32 %v989, %v990
    %v992 = vmul.f32 %v988, %v980
    %v993 = vmul.f32 %v787, %v977
    %v994 = vsub.f32 %v992, %v993
    %v995 = vsub.f32 0.0, %v324
    %v997 = vrot.slane %v941, 1
    %v999 = vmul.f32 %v941, %v997
    %v1001 = vrot.slane %v479, 1
    %v1003 = vmul.f32 %v941, %v1001
    %v1004 = vrot.slane %v479, 2
    %v1006 = vmul.f32 %v1003, %v1004
    %v1007 = vrot.slane %v941, 2
    %v1009 = vmul.f32 %v479, %v1007
    %v1010 = vsub.f32 %v1006, %v1009
    %v1011 = vmul.f32 %v1003, %v1007
    %v1012 = vmul.f32 %v479, %v1004
    %v1013 = vadd.f32 %v1011, %v1012
    %v1014 = vmul.f32 %v479, %v997
    %v1015 = vmul.f32 %v479, %v1001
    %v1016 = vmul.f32 %v1015, %v1004
    %v1017 = vmul.f32 %v941, %v1007
    %v1018 = vadd.f32 %v1016, %v1017
    %v1019 = vmul.f32 %v1015, %v1007
    %v1020 = vmul.f32 %v941, %v1004
    %v1021 = vsub.f32 %v1019, %v1020
    %v1022 = vsub.f32 0.0, %v479
    %v1023 = vmul.f32 %v972, %v999
    %v1024 = vadd.f32 %v1023, 0.0
    %v1025 = vmul.f32 %v983, %v1014
    %v1026 = vadd.f32 %v1024, %v1025
    %v1028 = vrot.slane %v1022, 1
    %v1030 = vmul.f32 %v986, %v1028
    %v1031 = vadd.f32 %v1026, %v1030
    %v1032 = vmul.f32 %v972, %v1010
    %v1033 = vadd.f32 %v1032, 0.0
    %v1034 = vmul.f32 %v983, %v1018
    %v1035 = vadd.f32 %v1033, %v1034
    %v1037 = vrot.slane %v1003, 1
    %v1039 = vmul.f32 %v986, %v1037
    %v1040 = vadd.f32 %v1035, %v1039
    %v1041 = vmul.f32 %v972, %v1013
    %v1042 = vadd.f32 %v1041, 0.0
    %v1043 = vmul.f32 %v983, %v1021
    %v1044 = vadd.f32 %v1042, %v1043
    %v1046 = vrot.slane %v999, 1
    %v1048 = vmul.f32 %v986, %v1046
    %v1049 = vadd.f32 %v1044, %v1048
    %v1050 = vmul.f32 %v987, %v999
    %v1051 = vadd.f32 %v1050, 0.0
    %v1052 = vmul.f32 %v991, %v1014
    %v1053 = vadd.f32 %v1051, %v1052
    %v1054 = vmul.f32 %v994, %v1028
    %v1055 = vadd.f32 %v1053, %v1054
    %v1056 = vmul.f32 %v987, %v1010
    %v1057 = vadd.f32 %v1056, 0.0
    %v1058 = vmul.f32 %v991, %v1018
    %v1059 = vadd.f32 %v1057, %v1058
    %v1060 = vmul.f32 %v994, %v1037
    %v1061 = vadd.f32 %v1059, %v1060
    %v1062 = vmul.f32 %v987, %v1013
    %v1063 = vadd.f32 %v1062, 0.0
    %v1064 = vmul.f32 %v991, %v1021
    %v1065 = vadd.f32 %v1063, %v1064
    %v1066 = vmul.f32 %v994, %v1046
    %v1067 = vadd.f32 %v1065, %v1066
    %v1068 = vrot.slane %v999, 7
    %v1070 = vmul.f32 %v995, %v1068
    %v1071 = vadd.f32 %v1070, 0.0
    %v1073 = vrot.slane %v1014, 7
    %v1075 = vmul.f32 %v976, %v1073
    %v1076 = vadd.f32 %v1071, %v1075
    %v1077 = vmul.f32 %v972, %v1022
    %v1078 = vadd.f32 %v1076, %v1077
    %v1080 = vrot.slane %v1010, 7
    %v1082 = vmul.f32 %v995, %v1080
    %v1083 = vadd.f32 %v1082, 0.0
    %v1085 = vrot.slane %v1018, 7
    %v1087 = vmul.f32 %v976, %v1085
    %v1088 = vadd.f32 %v1083, %v1087
    %v1089 = vmul.f32 %v972, %v1003
    %v1090 = vadd.f32 %v1088, %v1089
    %v1092 = vrot.slane %v1013, 7
    %v1094 = vmul.f32 %v995, %v1092
    %v1095 = vadd.f32 %v1094, 0.0
    %v1097 = vrot.slane %v1021, 7
    %v1099 = vmul.f32 %v976, %v1097
    %v1100 = vadd.f32 %v1095, %v1099
    %v1101 = vadd.f32 %v1100, %v1023
    %v1103 = vrot.slane %v14, 5
    %v1105 = vmul.f32 %v972, %v1103
    %v1106 = vadd.f32 %v1105, 0.0
    %v1107 = vrot.slane %v14, 6
    %v1109 = vmul.f32 %v983, %v1107
    %v1110 = vadd.f32 %v1106, %v1109
    %v1111 = vrot.slane %v14, 7
    %v1113 = vmul.f32 %v986, %v1111
    %v1114 = vadd.f32 %v1110, %v1113
    %v1116 = vrot.slane %v13, 5
    %v1118 = vadd.f32 %v1114, %v1116
    %v1119 = vmul.f32 %v987, %v1103
    %v1120 = vadd.f32 %v1119, 0.0
    %v1121 = vmul.f32 %v991, %v1107
    %v1122 = vadd.f32 %v1120, %v1121
    %v1123 = vmul.f32 %v994, %v1111
    %v1124 = vadd.f32 %v1122, %v1123
    %v1125 = vrot.slane %v13, 6
    %v1127 = vadd.f32 %v1124, %v1125
    %v1128 = vrot.slane %v14, 4
    %v1130 = vmul.f32 %v995, %v1128
    %v1131 = vadd.f32 %v1130, 0.0
    %v1132 = vmul.f32 %v976, %v1103
    %v1133 = vadd.f32 %v1131, %v1132
    %v1134 = vmul.f32 %v972, %v1107
    %v1135 = vadd.f32 %v1133, %v1134
    %v1136 = vadd.f32 %v1135, %v1125
    %v1137 = vmul.f32 %v945, %v1031
    %v1138 = vadd.f32 %v1137, 0.0
    %v1139 = vmul.f32 %v956, %v1055
    %v1140 = vadd.f32 %v1138, %v1139
    %v1142 = vrot.slane %v1078, 1
    %v1144 = vmul.f32 %v959, %v1142
    %v1145 = vadd.f32 %v1140, %v1144
    %v1146 = vmul.f32 %v960, %v1031
    %v1147 = vadd.f32 %v1146, 0.0
    %v1148 = vmul.f32 %v964, %v1055
    %v1149 = vadd.f32 %v1147, %v1148
    %v1150 = vmul.f32 %v967, %v1142
    %v1151 = vadd.f32 %v1149, %v1150
    %v1153 = vrot.slane %v1031, 7
    %v1155 = vmul.f32 %v968, %v1153
    %v1156 = vadd.f32 %v1155, 0.0
    %v1158 = vrot.slane %v1055, 7
    %v1160 = vmul.f32 %v949, %v1158
    %v1161 = vadd.f32 %v1156, %v1160
    %v1162 = vmul.f32 %v945, %v1078
    %v1163 = vadd.f32 %v1161, %v1162
    %v1165 = vrot.slane %v1040, 7
    %v1167 = vmul.f32 %v968, %v1165
    %v1168 = vadd.f32 %v1167, 0.0
    %v1170 = vrot.slane %v1061, 7
    %v1172 = vmul.f32 %v949, %v1170
    %v1173 = vadd.f32 %v1168, %v1172
    %v1174 = vmul.f32 %v945, %v1090
    %v1175 = vadd.f32 %v1173, %v1174
    %v1177 = vrot.slane %v1049, 7
    %v1179 = vmul.f32 %v968, %v1177
    %v1180 = vadd.f32 %v1179, 0.0
    %v1182 = vrot.slane %v1067, 7
    %v1184 = vmul.f32 %v949, %v1182
    %v1185 = vadd.f32 %v1180, %v1184
    %v1186 = vmul.f32 %v945, %v1101
    %v1187 = vadd.f32 %v1185, %v1186
    %v1188 = vmul.f32 %v945, %v1118
    %v1189 = vadd.f32 %v1188, 0.0
    %v1190 = vmul.f32 %v956, %v1127
    %v1191 = vadd.f32 %v1189, %v1190
    %v1193 = vrot.slane %v1136, 1
    %v1195 = vmul.f32 %v959, %v1193
    %v1196 = vadd.f32 %v1191, %v1195
    %v1198 = vrot.slane %v12, 5
    %v1200 = vadd.f32 %v1196, %v1198
    %v1201 = vmul.f32 %v960, %v1118
    %v1202 = vadd.f32 %v1201, 0.0
    %v1203 = vmul.f32 %v964, %v1127
    %v1204 = vadd.f32 %v1202, %v1203
    %v1205 = vmul.f32 %v967, %v1193
    %v1206 = vadd.f32 %v1204, %v1205
    %v1207 = vrot.slane %v12, 6
    %v1209 = vadd.f32 %v1206, %v1207
    %v1211 = vrot.slane %v1118, 7
    %v1213 = vmul.f32 %v968, %v1211
    %v1214 = vadd.f32 %v1213, 0.0
    %v1216 = vrot.slane %v1127, 7
    %v1218 = vmul.f32 %v949, %v1216
    %v1219 = vadd.f32 %v1214, %v1218
    %v1220 = vmul.f32 %v945, %v1136
    %v1221 = vadd.f32 %v1219, %v1220
    %v1222 = vadd.f32 %v1221, %v1207
    %v1223 = vmul.f32 %v1145, %v1145
    %v1224 = vmul.f32 %v1151, %v1151
    %v1225 = vadd.f32 %v1223, %v1224
    %v1226 = vrsqrt.pop %v1225
    %v1227 = vmul.f32 %v1226, %v1225
    %v1228 = vmul.f32 %v1227, %v1226
    %v1229 = vmul.f32 0.5, %v1228
    %v1230 = vsub.f32 1.5, %v1229
    %v1231 = vmul.f32 %v1226, %v1230
    %v1232 = vmul.f32 %v1225, %v1231
    %vm1233 = vcmp.eq.f32.partialorder %v1225, inf
    %v1234 = vsel %vm1233, %v1225, %v1232
    %vm1235 = vcmp.eq.f32.partialorder %v1225, 0.0
    %v1236 = vand.u32 %v1225, 2147483648
    %v1237 = vsel %vm1235, %v1236, %v1234
    %v1238 = vsub.f32 0.0, %v1163
    %v1240 = vrot.slane %v1151, 3
    %v1243 = vrot.slane %v1238, 3
    %v1246 = vrot.slane %v1175, 2
    %vm1248 = vcmask 1040384
    %v1249 = vsel %vm1248, %v1240, %v1243
    %vm1250 = vcmask 1041408
    %v1251 = vsel %vm1250, %v1249, %v1246
    %v1253 = vrot.slane %v1145, 3
    %v1256 = vrot.slane %v1237, 2
    %v1259 = vrot.slane %v1187, 2
    %v1261 = vsel %vm1248, %v1253, %v1256
    %v1262 = vsel %vm1250, %v1261, %v1259
    %vm1263 = vcmp.ne.f32.partialorder %v1262, 0.0
    %v1264 = vsel %vm1263, %v1262, 1.0
    %v1265 = vrcp.pop %v1264
    %v1266 = vmul.f32 %v1264, %v1265
    %v1267 = vsub.f32 2.0, %v1266
    %v1268 = vmul.f32 %v1265, %v1267
    %v1269 = vmul.f32 %v1251, %v1268
    %v1270 = vand.u32 2147483647, %v1269
    %vm1271 = vcmp.gt.f32.partialorder %v1270, 2.4142137
    %vm1272 = vcmp.gt.f32.partialorder %v1270, 0.41421357
    %vm1273 = vmxor %vm1271, 1
    %vm1274 = vmand %vm1272, %vm1273
    %vm1275 = vcmp.gt.f32.partialorder %v1270, 0.0
    %v1276 = vsel %vm1275, %v1270, 1.0
    %v1277 = vrcp.pop %v1276
    %v1278 = vmul.f32 %v1276, %v1277
    %v1279 = vsub.f32 2.0, %v1278
    %v1280 = vmul.f32 %v1277, %v1279
    %v1281 = vadd.f32 %v1270, 1.0
    %v1282 = vrcp.pop %v1281
    %v1283 = vmul.f32 %v1281, %v1282
    %v1284 = vsub.f32 2.0, %v1283
    %v1285 = vmul.f32 %v1282, %v1284
    %v1286 = vsub.f32 0.0, %v1280
    %v1287 = vsub.f32 %v1270, 1.0
    %v1288 = vmul.f32 %v1287, %v1285
    %v1289 = vsel %vm1274, %v1288, %v1270
    %v1290 = vsel %vm1271, %v1286, %v1289
    %v1291 = vsel %vm1274, 0.7853982, 0.0
    %v1292 = vsel %vm1271, 1.5707964, %v1291
    %v1293 = vmul.f32 %v1290, %v1290
    %v1294 = vmul.f32 %v1293, 0.080537446
    %v1295 = vsub.f32 %v1294, 0.13877685
    %v1296 = vmul.f32 %v1295, %v1293
    %v1297 = vadd.f32 %v1296, 0.19977711
    %v1298 = vmul.f32 %v1297, %v1293
    %v1299 = vsub.f32 %v1298, 0.3333295
    %v1300 = vmul.f32 %v1299, %v1293
    %v1301 = vmul.f32 %v1300, %v1290
    %v1302 = vadd.f32 %v1301, %v1290
    %v1303 = vadd.f32 %v1292, %v1302
    %vm1304 = vcmp.lt.f32.partialorder %v1269, 0.0
    %v1305 = vsub.f32 0.0, %v1303
    %v1306 = vsel %vm1304, %v1305, %v1303
    %vm1307 = vcmp.gt.f32.partialorder %v1262, 0.0
    %vm1308 = vcmp.lt.f32.partialorder %v1262, 0.0
    %vm1309 = vcmp.ge.f32.partialorder %v1251, 0.0
    %v1310 = vadd.f32 %v1306, 3.1415927
    %v1311 = vsub.f32 %v1306, 3.1415927
    %v1312 = vsel %vm1309, %v1310, %v1311
    %vm1313 = vcmp.gt.f32.partialorder %v1251, 0.0
    %vm1314 = vcmp.lt.f32.partialorder %v1251, 0.0
    %v1315 = vsel %vm1314, -1.5707964, 0.0
    %v1316 = vsel %vm1313, 1.5707964, %v1315
    %v1317 = vsel %vm1308, %v1312, %v1316
    %v1318 = vsel %vm1307, %v1306, %v1317
    %v1320 = vrot.slane %v1200, 3
    %v1323 = vrot.slane %v1209, 2
    %v1326 = vrot.slane %v1222, 2
    %v1329 = vrot.slane %v1318, 5
    %v1331 = vsel %vm1248, %v1320, %v1323
    %v1332 = vsel %vm1250, %v1331, %v1326
    %vm1333 = vcmask 1042432
    %v1334 = vsel %vm1333, %v1332, %v1329
    %vm1335 = vcmask 1045504
    %v1336 = vsel %vm1335, %v1334, 0.0
    %v1337 = vsel %vm1248, 1.0, 0.0
    %v1338 = vld [vmem:[%s1] sm:$0xff]
    %v1339 = vld [vmem:[%s1 + $0x8] sm:$0xff]
    %v1340 = vld [vmem:[%s1 + $0x10] sm:$0xff]
    %v1341 = vld [vmem:[%s1 + $0x18] sm:$0xff]
    %v1342 = vld [vmem:[%s1 + $0x20] sm:$0xff]
    %v1343 = vld [vmem:[%s1 + $0x28] sm:$0xff]
    %v1344 = vld [vmem:[%s1 + $0x30] sm:$0xff]
    %v1345 = vld [vmem:[%s1 + $0x38] sm:$0xff]
    %v1346 = vld [vmem:[%s1 + $0x40] sm:$0xff]
    %v1347 = vld [vmem:[%s1 + $0x48] sm:$0xff]
    %v1348 = vld [vmem:[%s1 + $0x50] sm:$0xff]
    %vm1349 = vcmask 326656
    %v1351 = vsel %vm1349, %v1338, 0
    %v1354 = vsel %vm1349, %v1339, 0
    %v1357 = vsel %vm1349, %v1340, 0
    %v1360 = vsel %vm1349, %v1341, 0
    %v1363 = vsel %vm1349, %v1342, 0
    %1365 = vmatpush.msra.mxu0 0.0
    %1366 = vmatpush.msra.mxu0 0.0
    %1367 = vmatpush.msra.mxu0 0.0
    %1368 = vmatpush.msra.mxu0 0.0
    %1369 = vmatpush.msra.mxu0 0.0
    %1370 = vmatpush.msra.mxu0 0.0
    %1371 = vmatpush.msra.mxu0 0.0
    %1372 = vmatpush.msra.mxu0 0.0
    %1373 = vmatpush.msra.mxu0 0.0
    %1374 = vmatpush.msra.mxu0 0.0
    %1375 = vmatpush.msra.mxu0 0.0
    %1376 = vmatpush.msra.mxu0 %v1337
    %1377 = vmatpush.msra.mxu0 0.0
    %1378 = vmatpush.msra.mxu0 0.0
    %1379 = vmatpush.msra.mxu0 0.0
    %1380 = vmatpush.msra.mxu0 %v1336
    %1381 = vmatmul.f32.gmra.mxu0 %v1351
    %v1382 = vpop.f32.mrf.mxu0
    %v1383 = vadd.f32 0.0, %v1382
    %1384 = vmatmul.f32.gmra.mxu0 %v1354
    %v1385 = vpop.f32.mrf.mxu0
    %v1386 = vadd.f32 0.0, %v1385
    %1387 = vmatmul.f32.gmra.mxu0 %v1357
    %v1388 = vpop.f32.mrf.mxu0
    %v1389 = vadd.f32 0.0, %v1388
    %1390 = vmatmul.f32.gmra.mxu0 %v1360
    %v1391 = vpop.f32.mrf.mxu0
    %v1392 = vadd.f32 0.0, %v1391
    %1393 = vmatmul.f32.gmra.mxu0 %v1363
    %v1394 = vpop.f32.mrf.mxu0
    %v1395 = vadd.f32 0.0, %v1394
    %1396 = vdwg.mxu0
    %v1397 = vmax.f32 %v1383, 0.0
    %v1398 = vmax.f32 %v1386, 0.0
    %v1399 = vmax.f32 %v1389, 0.0
    %v1400 = vmax.f32 %v1392, 0.0
    %v1401 = vmax.f32 %v1395, 0.0
    %v1403 = vsel %vm1349, %v1343, 0
    %v1406 = vsel %vm1349, %v1344, 0
    %v1409 = vsel %vm1349, %v1345, 0
    %v1412 = vsel %vm1349, %v1346, 0
    %v1415 = vsel %vm1349, %v1347, 0
    %1417 = vmatpush.msra.mxu0 0.0
    %1418 = vmatpush.msra.mxu0 0.0
    %1419 = vmatpush.msra.mxu0 0.0
    %1420 = vmatpush.msra.mxu0 0.0
    %1421 = vmatpush.msra.mxu0 0.0
    %1422 = vmatpush.msra.mxu0 0.0
    %1423 = vmatpush.msra.mxu0 0.0
    %1424 = vmatpush.msra.mxu0 0.0
    %1425 = vmatpush.msra.mxu0 0.0
    %1426 = vmatpush.msra.mxu0 0.0
    %1427 = vmatpush.msra.mxu0 0.0
    %1428 = vmatpush.msra.mxu0 %v1401
    %1429 = vmatpush.msra.mxu0 %v1400
    %1430 = vmatpush.msra.mxu0 %v1399
    %1431 = vmatpush.msra.mxu0 %v1398
    %1432 = vmatpush.msra.mxu0 %v1397
    %1433 = vmatmul.f32.gmra.mxu0 %v1403
    %v1434 = vpop.f32.mrf.mxu0
    %v1435 = vadd.f32 0.0, %v1434
    %1436 = vmatmul.f32.gmra.mxu0 %v1406
    %v1437 = vpop.f32.mrf.mxu0
    %v1438 = vadd.f32 0.0, %v1437
    %1439 = vmatmul.f32.gmra.mxu0 %v1409
    %v1440 = vpop.f32.mrf.mxu0
    %v1441 = vadd.f32 0.0, %v1440
    %1442 = vmatmul.f32.gmra.mxu0 %v1412
    %v1443 = vpop.f32.mrf.mxu0
    %v1444 = vadd.f32 0.0, %v1443
    %1445 = vmatmul.f32.gmra.mxu0 %v1415
    %v1446 = vpop.f32.mrf.mxu0
    %v1447 = vadd.f32 0.0, %v1446
    %1448 = vdwg.mxu0
    %v1449 = vmax.f32 %v1435, 0.0
    %v1450 = vmax.f32 %v1438, 0.0
    %v1451 = vmax.f32 %v1441, 0.0
    %v1452 = vmax.f32 %v1444, 0.0
    %v1453 = vmax.f32 %v1447, 0.0
    %v1455 = vsel %vm1349, %v1348, 0
    %1457 = vmatpush.msra.mxu0 0.0
    %1458 = vmatpush.msra.mxu0 0.0
    %1459 = vmatpush.msra.mxu0 0.0
    %1460 = vmatpush.msra.mxu0 0.0
    %1461 = vmatpush.msra.mxu0 0.0
    %1462 = vmatpush.msra.mxu0 0.0
    %1463 = vmatpush.msra.mxu0 0.0
    %1464 = vmatpush.msra.mxu0 0.0
    %1465 = vmatpush.msra.mxu0 0.0
    %1466 = vmatpush.msra.mxu0 0.0
    %1467 = vmatpush.msra.mxu0 0.0
    %1468 = vmatpush.msra.mxu0 %v1453
    %1469 = vmatpush.msra.mxu0 %v1452
    %1470 = vmatpush.msra.mxu0 %v1451
    %1471 = vmatpush.msra.mxu0 %v1450
    %1472 = vmatpush.msra.mxu0 %v1449
    %1473 = vmatmul.f32.gmra.mxu0 %v1455
    %v1474 = vpop.f32.mrf.mxu0
    %v1475 = vadd.f32 0.0, %v1474
    %1476 = vdwg.mxu0
    %v1477 = vsub.f32 %v1475, %v1336
    %v1478 = vand.u32 2147483647, %v1477
    %vm1479 = vcmask 62464
    %v1480 = vsel %vm1479, %v1478, 0.0
    %1481 = vadd.xlane.f32.xlu0 %v1480
    %v1482 = vpop.xlane.xlu0 %1481
    %v1483 = vand.u32 2147483647, %v12
    %v1484 = vand.u32 2147483647, %v14
    %vm1485 = vcmask 64512
    %v1486 = vsel %vm1485, %v1483, 0.0
    %1487 = vadd.xlane.f32.xlu0 %v1486
    %v1488 = vpop.xlane.xlu0 %1487
    %v1489 = vsel %vm1485, %v1484, 0.0
    %1490 = vadd.xlane.f32.xlu0 %v1489
    %v1491 = vpop.xlane.xlu0 %1490
    %v1492 = vsel %vm1333, %v1482, 0.0
    %v1493 = vrot.slane %v1492, 4
    %v1494 = vadd.f32 %v1492, %v1493
    %v1495 = vrot.slane %v1494, 2
    %v1496 = vadd.f32 %v1494, %v1495
    %v1497 = vrot.slane %v1496, 1
    %v1498 = vadd.f32 %v1496, %v1497
    %s1499 = vtos %v1498
    %v1500 = vrcp.pop 24.0
    %v1501 = vmul.f32 24.0, %v1500
    %v1502 = vsub.f32 1.0, %v1501
    %v1503 = vmul.f32 %v1500, %v1502
    %v1504 = vadd.f32 %v1500, %v1503
    %vm1505 = vweird.f32 %v1500
    %v1506 = vsel %vm1505, %v1500, %v1504
    %s1507 = vtos %v1506
    %s1508 = smul.f32 %s1499, %s1507
    %v1510 = vrot.slane %v1482, 3
    %v1512 = vsel %vm1333, %v1510, 0.0
    %v1513 = vrot.slane %v1512, 4
    %v1514 = vadd.f32 %v1512, %v1513
    %v1515 = vrot.slane %v1514, 2
    %v1516 = vadd.f32 %v1514, %v1515
    %v1517 = vrot.slane %v1516, 1
    %v1518 = vadd.f32 %v1516, %v1517
    %s1519 = vtos %v1518
    %v1520 = vrcp.pop 24.0
    %v1521 = vmul.f32 24.0, %v1520
    %v1522 = vsub.f32 1.0, %v1521
    %v1523 = vmul.f32 %v1520, %v1522
    %v1524 = vadd.f32 %v1520, %v1523
    %vm1525 = vweird.f32 %v1520
    %v1526 = vsel %vm1525, %v1520, %v1524
    %s1527 = vtos %v1526
    %s1528 = smul.f32 %s1519, %s1527
    %v1529 = vrot.slane %v1488, 4
    %v1530 = vadd.f32 %v1488, %v1529
    %v1531 = vrot.slane %v1530, 2
    %v1532 = vadd.f32 %v1530, %v1531
    %v1533 = vrot.slane %v1532, 1
    %v1534 = vadd.f32 %v1532, %v1533
    %s1535 = vtos %v1534
    %v1536 = vrot.slane %v1491, 4
    %v1537 = vadd.f32 %v1491, %v1536
    %v1538 = vrot.slane %v1537, 2
    %v1539 = vadd.f32 %v1537, %v1538
    %v1540 = vrot.slane %v1539, 1
    %v1541 = vadd.f32 %v1539, %v1540
    %s1542 = vtos %v1541
    %s1543 = sadd.f32 %s1535, %s1542
    %v1544 = vrcp.pop 48.0
    %v1545 = vmul.f32 48.0, %v1544
    %v1546 = vsub.f32 1.0, %v1545
    %v1547 = vmul.f32 %v1544, %v1546
    %v1548 = vadd.f32 %v1544, %v1547
    %vm1549 = vweird.f32 %v1544
    %v1550 = vsel %vm1549, %v1544, %v1548
    %s1551 = vtos %v1550
    %s1552 = smul.f32 %s1543, %s1551
    %s1553 = sadd.f32 %s1508, %s1528
    %s1554 = smul.f32 %s1553, 0.5
    %s1555 = smul.f32 %s1552, 0.001
    %s1556 = sadd.f32 %s1554, %s1555
    %s1557 = scalar_lea.smem [#allocation2], 0
    %1558 = sst [smem:[%s1557]] %s1556
    %s1559 = scalar_lea.smem [#allocation2], 1
    %1560 = sst [smem:[%s1559]] %s1508
    %s1561 = scalar_lea.smem [#allocation2], 2
    %1562 = sst [smem:[%s1561]] %s1528
    %s1563 = scalar_lea.smem [#allocation2], 3
    %1564 = sst [smem:[%s1563]] %s1552
    // Predicated region
    $region10: #{_lambda_.1} parent=1 // pred_check
      _
    $region11: #{_lambda_.1} parent=1 // pred_check_branch
      %1566 = sbr.rel (0) target = $region13
    $region12: #{_lambda_.1} parent=1 // pred_region
      %1568 = vsyncadd [#allocation3], 0
      %s1570 = sshll.u32 %s2, 4
      %s1571 = int_to_ptr.vmem [resolvable:$true] %s1570
      %1573 = dma.smem_to_vmem [#allocation2], 16, %s1571, [#allocation3]
    $region13: #{_lambda_.1} parent=1 // pred_fallthru
      _
    // Predicated region
    $region14: #{_lambda_.1} parent=1 // pred_check
      _
    $region15: #{_lambda_.1} parent=1 // pred_check_branch
      %1575 = sbr.rel (0) target = $region17
    $region16: #{_lambda_.1} parent=1 // pred_region
      %1577 = dma.done [#allocation3], 16
    $region17: #{_lambda_.1} parent=1 // pred_fallthru
      _
    %1578 = sfence
    %1579 = vsyncpa [#allocation3], 1

</llo_original>
